<compile_context>
chip_gen: v7x
topology: tpu7x:2x2x1
jax: 0.10.0
libtpu: 0.0.40
codegen_flags: <defaults>
</compile_context>

<pallas_src>
import numpy as np

import jax
import jax.numpy as jnp
from jax.experimental import pallas as pl
from jax.experimental.pallas import tpu as pltpu


# ------------------------------ fused Pallas kernel --------------------------------

def _model3_fused_kernel(x1_ref, x2_ref, x3_ref,
                         w1_ref, s1_ref, b1_ref,
                         w2_ref, s2_ref, b2_ref,
                         w3_ref, b3_ref,
                         lmat_ref, bl_ref,
                         out_ref):
    """Whole Model3 forward on flattened (C, H*W) slabs, all intermediates VMEM-resident.

    conv1 (stride-2, pad-1) is  sum_tap (W_tap @ x_flat) @ S1_tap  with constant 0/1
    scatter matrices (stored bf16, exact).  conv2 (stride-1, pad-0) uses ONE shared base
    scatter (14-pitch -> 16-pitch) and applies each tap's (kh,kw) offset as a static
    lane roll on the XLU, so only a single (196,256) scatter constant is shipped.
    """
    f32 = jnp.float32

    # ---- v1 = conv(x1); v3 = v1 * sigmoid(v1)  (silu fused) ------------------------
    m1 = jnp.dot(w1_ref[...], x1_ref[...], preferred_element_type=f32)      # (32, 64)
    s1 = s1_ref[...].astype(f32)                                            # (4, 64, 196)
    v1 = b1_ref[...]                                                        # (8, 1)
    for t in range(4):                                                      # 2x2 taps
        v1 = v1 + jnp.dot(m1[8 * t:8 * (t + 1), :], s1[t],
                          preferred_element_type=f32)                       # (8, 196)
    v3 = v1 * jax.nn.sigmoid(v1)                                            # rows 4..7 == 0

    # ---- v4 = conv2(v3): single base scatter + per-tap static lane roll ------------
    m2 = jnp.dot(w2_ref[...], v3, preferred_element_type=f32)               # (72, 196)
    s2b = s2_ref[...].astype(f32)                                           # (196, 256)
    v4 = b2_ref[...]                                                        # (8, 1)
    for kh in range(3):
        for kw in range(3):
            t = kh * 3 + kw
            contrib = jnp.dot(m2[8 * t:8 * (t + 1), :], s2b,
                              preferred_element_type=f32)                   # (8, 256)
            shift = kh * 16 + kw
            if shift:
                contrib = pltpu.roll(contrib, shift, axis=1)                # XLU, free slot
            v4 = v4 + contrib

    # ---- v5 = conv3(v4) (1x1 -> plain channel matmul); v7 = v5 * sigmoid(v5) --------
    v5 = jnp.dot(w3_ref[...], v4, preferred_element_type=f32) + b3_ref[...]  # (8, 256)
    v7 = v5 * jax.nn.sigmoid(v5)

    # ---- y = Linear(sigmoid(abs(cat((v7, x2, x3), -3)))) ----------------------------
    z = jnp.concatenate([v7, x2_ref[...], x3_ref[...]], axis=0)             # (22, 256)
    z = jax.nn.sigmoid(jnp.abs(z))
    out_ref[...] = (jnp.dot(z, lmat_ref[...], preferred_element_type=f32)
                    + bl_ref[...])                                          # (22, 16)


# ------------------------- one-time parameter preparation --------------------------

def prepare_params(raw):
    """Transform PyTorch-layout weights into kernel-ready constants (run once, outside jit)."""
    w1 = np.asarray(raw["w1"], np.float32); b1 = np.asarray(raw["b1"], np.float32)
    w2 = np.asarray(raw["w2"], np.float32); b2 = np.asarray(raw["b2"], np.float32)
    w3 = np.asarray(raw["w3"], np.float32); b3 = np.asarray(raw["b3"], np.float32)
    wl = np.asarray(raw["wl"], np.float32); bl = np.asarray(raw["bl"], np.float32)

    # conv1: ConvTranspose2d(3->4, k=2, stride=2, padding=1): (3,8,8) -> (4,14,14)
    # K padded 3 -> 8 so the (32,.)@(.,64) matmul is sublane-aligned.
    w1p = np.zeros((4 * 8, 8), np.float32)
    s1 = np.zeros((4, 8 * 8, 14 * 14), np.float32)
    for kh in range(2):
        for kw in range(2):
            t = kh * 2 + kw
            w1p[8 * t:8 * t + 4, :3] = w1[:, :, kh, kw].T            # (co, ci)
            for ih in range(8):
                for iw in range(8):
                    oh = 2 * ih - 1 + kh
                    ow = 2 * iw - 1 + kw
                    if 0 <= oh < 14 and 0 <= ow < 14:
                        s1[t, ih * 8 + iw, oh * 14 + ow] = 1.0
    b1p = np.zeros((8, 1), np.float32); b1p[:4, 0] = b1

    # conv2: ConvTranspose2d(4->4, k=3, stride=1, padding=0): (4,14,14) -> (4,16,16)
    # Single base scatter (kh=kw=0): input flat (ih*14+iw) -> output flat (ih*16+iw);
    # the per-tap (kh,kw) offset is applied in-kernel as a lane roll of kh*16+kw.
    w2p = np.zeros((9 * 8, 8), np.float32)
    s2b = np.zeros((14 * 14, 16 * 16), np.float32)
    for ih in range(14):
        for iw in range(14):
            s2b[ih * 14 + iw, ih * 16 + iw] = 1.0
    for kh in range(3):
        for kw in range(3):
            t = kh * 3 + kw
            w2p[8 * t:8 * t + 4, :4] = w2[:, :, kh, kw].T
    b2p = np.zeros((8, 1), np.float32); b2p[:4, 0] = b2

    # conv3: ConvTranspose2d(4->8, 1x1) == plain channel matmul on the flattened slab.
    w3p = np.zeros((8, 8), np.float32)
    w3p[:, :4] = w3[:, :, 0, 0].T                                   # (co, ci)
    b3p = b3.reshape(8, 1)

    # tail Linear(16 -> 1) along the last spatial dim as a block-diagonal (256,16) matrix.
    lmat = np.zeros((16 * 16, 16), np.float32)
    for h in range(16):
        lmat[h * 16:(h + 1) * 16, h] = wl[0, :]
    blp = bl.reshape(1, 1)

    # Scatter matrices are exactly 0/1 -> bf16 storage is lossless; halves DMA bytes.
    return dict(
        w1p=jnp.asarray(w1p), s1=jnp.asarray(s1, jnp.bfloat16), b1p=jnp.asarray(b1p),
        w2p=jnp.asarray(w2p), s2b=jnp.asarray(s2b, jnp.bfloat16), b2p=jnp.asarray(b2p),
        w3p=jnp.asarray(w3p), b3p=jnp.asarray(b3p),
        lmat=jnp.asarray(lmat), blp=jnp.asarray(blp),
    )


# --------------------------------- forward wrapper ---------------------------------

def model3_forward(kparams, x1, x2, x3):
    # x1: (1,3,8,8), x2: (1,4,16,16), x3: (1,10,16,16)   (NCHW, N=1)
    x1f = jnp.pad(x1.reshape(3, 8 * 8), ((0, 5), (0, 0)))   # K padded 3 -> 8 (sublane align)
    x2f = x2.reshape(4, 16 * 16)
    x3f = x3.reshape(10, 16 * 16)
    out = pl.pallas_call(
        _model3_fused_kernel,
        out_shape=jax.ShapeDtypeStruct((22, 16), jnp.float32),
        in_specs=[pl.BlockSpec(memory_space=pltpu.MemorySpace.VMEM)] * 13,
        out_specs=pl.BlockSpec(memory_space=pltpu.MemorySpace.VMEM),
    )(x1f, x2f, x3f,
      kparams["w1p"], kparams["s1"], kparams["b1p"],
      kparams["w2p"], kparams["s2b"], kparams["b2p"],
      kparams["w3p"], kparams["b3p"],
      kparams["lmat"], kparams["blp"])
    # (22, 16) -> (1, 22, 16, 1): Linear(16 -> 1) applied along the last NCHW dim.
    return out.reshape(1, 22, 16, 1)


# ------------------------------- NumPy reference -----------------------------------

def _reference_forward(raw, x1, x2, x3):
    """Straightforward NumPy reference for the (shape-repaired) Model3 forward."""
    def convt(x, w, b, stride, pad):            # x: (Cin,H,W), w: (Cin,Cout,kh,kw)
        _, co, kh, kw = w.shape
        _, h, win = x.shape
        full = np.zeros((co, (h - 1) * stride + kh, (win - 1) * stride + kw), np.float64)
        for dkh in range(kh):
            for dkw in range(kw):
                contrib = np.einsum("ihw,io->ohw", x, w[:, :, dkh, dkw])
                full[:, dkh:dkh + (h - 1) * stride + 1:stride,
                     dkw:dkw + (win - 1) * stride + 1:stride] += contrib
        oh = (h - 1) * stride - 2 * pad + kh
        ow = (win - 1) * stride - 2 * pad + kw
        return full[:, pad:pad + oh, pad:pad + ow] + b[:, None, None]

    def silu(v):
        return v / (1.0 + np.exp(-v))

    w1, b1 = np.asarray(raw["w1"], np.float64), np.asarray(raw["b1"], np.float64)
    w2, b2 = np.asarray(raw["w2"], np.float64), np.asarray(raw["b2"], np.float64)
    w3, b3 = np.asarray(raw["w3"], np.float64), np.asarray(raw["b3"], np.float64)
    wl, bl = np.asarray(raw["wl"], np.float64), np.asarray(raw["bl"], np.float64)

    v3 = silu(convt(np.asarray(x1, np.float64)[0], w1, b1, 2, 1))          # (4,14,14)
    v4 = convt(v3, w2, b2, 1, 0)                                           # (4,16,16)
    v7 = silu(convt(v4, w3, b3, 1, 0))                                     # (8,16,16)
    y = np.concatenate([v7, np.asarray(x2, np.float64)[0],
                        np.asarray(x3, np.float64)[0]], axis=0)            # (22,16,16)
    y = 1.0 / (1.0 + np.exp(-np.abs(y)))
    return np.einsum("chw,w->ch", y, wl[0]) + bl[0, 0]                     # (22,16)


# -------------------------------------- main ----------------------------------------

if __name__ == "__main__":
    key = jax.random.PRNGKey(0)
    ks = jax.random.split(key, 11)

    raw = {
        # conv  = ConvTranspose2d(3, 4, 2, stride=2, padding=1)
        "w1": 0.1 * jax.random.normal(ks[0], (3, 4, 2, 2), jnp.float32),
        "b1": 0.1 * jax.random.normal(ks[1], (4,), jnp.float32),
        # TODO(synk): original conv2 = ConvTranspose2d(8, 4, 3) is incompatible with its
        # 4-channel input v3; use in_channels=4 so the forward runs.
        "w2": 0.1 * jax.random.normal(ks[2], (4, 4, 3, 3), jnp.float32),
        "b2": 0.1 * jax.random.normal(ks[3], (4,), jnp.float32),
        # conv3 = ConvTranspose2d(4, 8, 1)
        "w3": 0.1 * jax.random.normal(ks[4], (4, 8, 1, 1), jnp.float32),
        "b3": 0.1 * jax.random.normal(ks[5], (8,), jnp.float32),
        # TODO(synk): original Linear(2, 1) can never match the final width (>=4);
        # use Linear(16, 1) to match the chosen spatial width.
        "wl": 0.1 * jax.random.normal(ks[6], (1, 16), jnp.float32),
        "bl": 0.1 * jax.random.normal(ks[7], (1, 1), jnp.float32),
    }

    # Input shapes chosen so every op in the forward is shape-consistent:
    # x1 (1,3,8,8) -> v3 (4,14,14) -> v4 (4,16,16) -> v7 (8,16,16); cat with
    # x2 (1,4,16,16) and x3 (1,10,16,16) gives (1,22,16,16).
    x1 = jax.random.normal(ks[8], (1, 3, 8, 8), jnp.float32)
    x2 = jax.random.normal(ks[9], (1, 4, 16, 16), jnp.float32)
    x3 = jax.random.normal(ks[10], (1, 10, 16, 16), jnp.float32)

    kparams = prepare_params(raw)                     # one-time, outside the jitted forward
    y = jax.jit(model3_forward)(kparams, x1, x2, x3)
    jax.block_until_ready(y)
    assert y.shape == (1, 22, 16, 1) and y.dtype == jnp.float32

    # Cross-check against an independent NumPy reference of the (repaired) module.
    y_ref = _reference_forward(raw, x1, x2, x3)       # (22, 16)
    err = float(np.max(np.abs(np.asarray(y)[0, :, :, 0] - y_ref)))
    assert err < 2e-2, f"kernel/reference mismatch: max abs err = {err}"

    print("KERNEL_OK")
</pallas_src>

<mosaic_0001>
module attributes {stable_mosaic.version = 11 : i64} {
  func.func @_model3_fused_kernel(%arg0: memref<8x64xf32, #tpu.memory_space<vmem>>, %arg1: memref<4x256xf32, #tpu.memory_space<vmem>>, %arg2: memref<10x256xf32, #tpu.memory_space<vmem>>, %arg3: memref<32x8xf32, #tpu.memory_space<vmem>>, %arg4: memref<4x64x196xbf16, #tpu.memory_space<vmem>>, %arg5: memref<8x1xf32, #tpu.memory_space<vmem>>, %arg6: memref<72x8xf32, #tpu.memory_space<vmem>>, %arg7: memref<196x256xbf16, #tpu.memory_space<vmem>>, %arg8: memref<8x1xf32, #tpu.memory_space<vmem>>, %arg9: memref<8x8xf32, #tpu.memory_space<vmem>>, %arg10: memref<8x1xf32, #tpu.memory_space<vmem>>, %arg11: memref<256x16xf32, #tpu.memory_space<vmem>>, %arg12: memref<1x1xf32, #tpu.memory_space<vmem>>, %arg13: memref<22x16xf32, #tpu.memory_space<vmem>>) attributes {dimension_semantics = [], scalar_prefetch = 0 : i64, scratch_operands = 0 : i64, tpu.core_type = #tpu.core_type<tc>} {
    %c0 = arith.constant 0 : index
    %c0_0 = arith.constant 0 : index
    %0 = vector.load %arg3[%c0, %c0_0] : memref<32x8xf32, #tpu.memory_space<vmem>>, vector<32x8xf32>
    %c0_1 = arith.constant 0 : index
    %c0_2 = arith.constant 0 : index
    %1 = vector.load %arg0[%c0_1, %c0_2] : memref<8x64xf32, #tpu.memory_space<vmem>>, vector<8x64xf32>
    %cst = arith.constant dense<0.000000e+00> : vector<32x64xf32>
    %2 = tpu.matmul %0, %1, %cst {dimension_numbers = #tpu.dot_dimension_numbers<[1], [0], [0], [1], [0, 0, 1, 1], [], []>} : vector<32x8xf32>, vector<8x64xf32>, vector<32x64xf32> -> vector<32x64xf32>
    %c0_3 = arith.constant 0 : index
    %c0_4 = arith.constant 0 : index
    %c0_5 = arith.constant 0 : index
    %3 = vector.load %arg4[%c0_3, %c0_4, %c0_5] : memref<4x64x196xbf16, #tpu.memory_space<vmem>>, vector<4x64x196xbf16>
    %4 = arith.extf %3 : vector<4x64x196xbf16> to vector<4x64x196xf32>
    %c0_6 = arith.constant 0 : index
    %c0_7 = arith.constant 0 : index
    %5 = vector.load %arg5[%c0_6, %c0_7] : memref<8x1xf32, #tpu.memory_space<vmem>>, vector<8x1xf32>
    %6 = vector.extract_strided_slice %2 {offsets = [0, 0], sizes = [8, 64], strides = [1, 1]} : vector<32x64xf32> to vector<8x64xf32>
    %7 = vector.extract_strided_slice %4 {offsets = [0, 0, 0], sizes = [1, 64, 196], strides = [1, 1, 1]} : vector<4x64x196xf32> to vector<1x64x196xf32>
    %8 = vector.shape_cast %7 : vector<1x64x196xf32> to vector<64x196xf32>
    %cst_8 = arith.constant dense<0.000000e+00> : vector<8x196xf32>
    %9 = tpu.matmul %6, %8, %cst_8 {dimension_numbers = #tpu.dot_dimension_numbers<[1], [0], [0], [1], [0, 0, 1, 1], [], []>} : vector<8x64xf32>, vector<64x196xf32>, vector<8x196xf32> -> vector<8x196xf32>
    %10 = vector.broadcast %5 : vector<8x1xf32> to vector<8x196xf32>
    %11 = arith.addf %10, %9 : vector<8x196xf32>
    %12 = vector.extract_strided_slice %2 {offsets = [8, 0], sizes = [8, 64], strides = [1, 1]} : vector<32x64xf32> to vector<8x64xf32>
    %13 = vector.extract_strided_slice %4 {offsets = [1, 0, 0], sizes = [1, 64, 196], strides = [1, 1, 1]} : vector<4x64x196xf32> to vector<1x64x196xf32>
    %14 = vector.shape_cast %13 : vector<1x64x196xf32> to vector<64x196xf32>
    %cst_9 = arith.constant dense<0.000000e+00> : vector<8x196xf32>
    %15 = tpu.matmul %12, %14, %cst_9 {dimension_numbers = #tpu.dot_dimension_numbers<[1], [0], [0], [1], [0, 0, 1, 1], [], []>} : vector<8x64xf32>, vector<64x196xf32>, vector<8x196xf32> -> vector<8x196xf32>
    %16 = arith.addf %11, %15 : vector<8x196xf32>
    %17 = vector.extract_strided_slice %2 {offsets = [16, 0], sizes = [8, 64], strides = [1, 1]} : vector<32x64xf32> to vector<8x64xf32>
    %18 = vector.extract_strided_slice %4 {offsets = [2, 0, 0], sizes = [1, 64, 196], strides = [1, 1, 1]} : vector<4x64x196xf32> to vector<1x64x196xf32>
    %19 = vector.shape_cast %18 : vector<1x64x196xf32> to vector<64x196xf32>
    %cst_10 = arith.constant dense<0.000000e+00> : vector<8x196xf32>
    %20 = tpu.matmul %17, %19, %cst_10 {dimension_numbers = #tpu.dot_dimension_numbers<[1], [0], [0], [1], [0, 0, 1, 1], [], []>} : vector<8x64xf32>, vector<64x196xf32>, vector<8x196xf32> -> vector<8x196xf32>
    %21 = arith.addf %16, %20 : vector<8x196xf32>
    %22 = vector.extract_strided_slice %2 {offsets = [24, 0], sizes = [8, 64], strides = [1, 1]} : vector<32x64xf32> to vector<8x64xf32>
    %23 = vector.extract_strided_slice %4 {offsets = [3, 0, 0], sizes = [1, 64, 196], strides = [1, 1, 1]} : vector<4x64x196xf32> to vector<1x64x196xf32>
    %24 = vector.shape_cast %23 : vector<1x64x196xf32> to vector<64x196xf32>
    %cst_11 = arith.constant dense<0.000000e+00> : vector<8x196xf32>
    %25 = tpu.matmul %22, %24, %cst_11 {dimension_numbers = #tpu.dot_dimension_numbers<[1], [0], [0], [1], [0, 0, 1, 1], [], []>} : vector<8x64xf32>, vector<64x196xf32>, vector<8x196xf32> -> vector<8x196xf32>
    %26 = arith.addf %21, %25 : vector<8x196xf32>
    %27 = arith.negf %26 : vector<8x196xf32>
    %28 = math.exp %27 : vector<8x196xf32>
    %cst_12 = arith.constant 1.000000e+00 : f32
    %29 = vector.broadcast %cst_12 : f32 to vector<8x196xf32>
    %30 = arith.addf %29, %28 : vector<8x196xf32>
    %31 = arith.divf %29, %30 : vector<8x196xf32>
    %32 = arith.mulf %26, %31 : vector<8x196xf32>
    %c0_13 = arith.constant 0 : index
    %c0_14 = arith.constant 0 : index
    %33 = vector.load %arg6[%c0_13, %c0_14] : memref<72x8xf32, #tpu.memory_space<vmem>>, vector<72x8xf32>
    %cst_15 = arith.constant dense<0.000000e+00> : vector<72x196xf32>
    %34 = tpu.matmul %33, %32, %cst_15 {dimension_numbers = #tpu.dot_dimension_numbers<[1], [0], [0], [1], [0, 0, 1, 1], [], []>} : vector<72x8xf32>, vector<8x196xf32>, vector<72x196xf32> -> vector<72x196xf32>
    %c0_16 = arith.constant 0 : index
    %c0_17 = arith.constant 0 : index
    %35 = vector.load %arg7[%c0_16, %c0_17] : memref<196x256xbf16, #tpu.memory_space<vmem>>, vector<196x256xbf16>
    %36 = arith.extf %35 : vector<196x256xbf16> to vector<196x256xf32>
    %c0_18 = arith.constant 0 : index
    %c0_19 = arith.constant 0 : index
    %37 = vector.load %arg8[%c0_18, %c0_19] : memref<8x1xf32, #tpu.memory_space<vmem>>, vector<8x1xf32>
    %38 = vector.extract_strided_slice %34 {offsets = [0, 0], sizes = [8, 196], strides = [1, 1]} : vector<72x196xf32> to vector<8x196xf32>
    %cst_20 = arith.constant dense<0.000000e+00> : vector<8x256xf32>
    %39 = tpu.matmul %38, %36, %cst_20 {dimension_numbers = #tpu.dot_dimension_numbers<[1], [0], [0], [1], [0, 0, 1, 1], [], []>} : vector<8x196xf32>, vector<196x256xf32>, vector<8x256xf32> -> vector<8x256xf32>
    %40 = vector.broadcast %37 : vector<8x1xf32> to vector<8x256xf32>
    %41 = arith.addf %40, %39 : vector<8x256xf32>
    %42 = vector.extract_strided_slice %34 {offsets = [8, 0], sizes = [8, 196], strides = [1, 1]} : vector<72x196xf32> to vector<8x196xf32>
    %cst_21 = arith.constant dense<0.000000e+00> : vector<8x256xf32>
    %43 = tpu.matmul %42, %36, %cst_21 {dimension_numbers = #tpu.dot_dimension_numbers<[1], [0], [0], [1], [0, 0, 1, 1], [], []>} : vector<8x196xf32>, vector<196x256xf32>, vector<8x256xf32> -> vector<8x256xf32>
    %c1_i32 = arith.constant 1 : i32
    %44 = tpu.dynamic_rotate %43 by %c1_i32 dim 1 : vector<8x256xf32>, i32 -> vector<8x256xf32>
    %45 = arith.addf %41, %44 : vector<8x256xf32>
    %46 = vector.extract_strided_slice %34 {offsets = [16, 0], sizes = [8, 196], strides = [1, 1]} : vector<72x196xf32> to vector<8x196xf32>
    %cst_22 = arith.constant dense<0.000000e+00> : vector<8x256xf32>
    %47 = tpu.matmul %46, %36, %cst_22 {dimension_numbers = #tpu.dot_dimension_numbers<[1], [0], [0], [1], [0, 0, 1, 1], [], []>} : vector<8x196xf32>, vector<196x256xf32>, vector<8x256xf32> -> vector<8x256xf32>
    %c2_i32 = arith.constant 2 : i32
    %48 = tpu.dynamic_rotate %47 by %c2_i32 dim 1 : vector<8x256xf32>, i32 -> vector<8x256xf32>
    %49 = arith.addf %45, %48 : vector<8x256xf32>
    %50 = vector.extract_strided_slice %34 {offsets = [24, 0], sizes = [8, 196], strides = [1, 1]} : vector<72x196xf32> to vector<8x196xf32>
    %cst_23 = arith.constant dense<0.000000e+00> : vector<8x256xf32>
    %51 = tpu.matmul %50, %36, %cst_23 {dimension_numbers = #tpu.dot_dimension_numbers<[1], [0], [0], [1], [0, 0, 1, 1], [], []>} : vector<8x196xf32>, vector<196x256xf32>, vector<8x256xf32> -> vector<8x256xf32>
    %c16_i32 = arith.constant 16 : i32
    %52 = tpu.dynamic_rotate %51 by %c16_i32 dim 1 : vector<8x256xf32>, i32 -> vector<8x256xf32>
    %53 = arith.addf %49, %52 : vector<8x256xf32>
    %54 = vector.extract_strided_slice %34 {offsets = [32, 0], sizes = [8, 196], strides = [1, 1]} : vector<72x196xf32> to vector<8x196xf32>
    %cst_24 = arith.constant dense<0.000000e+00> : vector<8x256xf32>
    %55 = tpu.matmul %54, %36, %cst_24 {dimension_numbers = #tpu.dot_dimension_numbers<[1], [0], [0], [1], [0, 0, 1, 1], [], []>} : vector<8x196xf32>, vector<196x256xf32>, vector<8x256xf32> -> vector<8x256xf32>
    %c17_i32 = arith.constant 17 : i32
    %56 = tpu.dynamic_rotate %55 by %c17_i32 dim 1 : vector<8x256xf32>, i32 -> vector<8x256xf32>
    %57 = arith.addf %53, %56 : vector<8x256xf32>
    %58 = vector.extract_strided_slice %34 {offsets = [40, 0], sizes = [8, 196], strides = [1, 1]} : vector<72x196xf32> to vector<8x196xf32>
    %cst_25 = arith.constant dense<0.000000e+00> : vector<8x256xf32>
    %59 = tpu.matmul %58, %36, %cst_25 {dimension_numbers = #tpu.dot_dimension_numbers<[1], [0], [0], [1], [0, 0, 1, 1], [], []>} : vector<8x196xf32>, vector<196x256xf32>, vector<8x256xf32> -> vector<8x256xf32>
    %c18_i32 = arith.constant 18 : i32
    %60 = tpu.dynamic_rotate %59 by %c18_i32 dim 1 : vector<8x256xf32>, i32 -> vector<8x256xf32>
    %61 = arith.addf %57, %60 : vector<8x256xf32>
    %62 = vector.extract_strided_slice %34 {offsets = [48, 0], sizes = [8, 196], strides = [1, 1]} : vector<72x196xf32> to vector<8x196xf32>
    %cst_26 = arith.constant dense<0.000000e+00> : vector<8x256xf32>
    %63 = tpu.matmul %62, %36, %cst_26 {dimension_numbers = #tpu.dot_dimension_numbers<[1], [0], [0], [1], [0, 0, 1, 1], [], []>} : vector<8x196xf32>, vector<196x256xf32>, vector<8x256xf32> -> vector<8x256xf32>
    %c32_i32 = arith.constant 32 : i32
    %64 = tpu.dynamic_rotate %63 by %c32_i32 dim 1 : vector<8x256xf32>, i32 -> vector<8x256xf32>
    %65 = arith.addf %61, %64 : vector<8x256xf32>
    %66 = vector.extract_strided_slice %34 {offsets = [56, 0], sizes = [8, 196], strides = [1, 1]} : vector<72x196xf32> to vector<8x196xf32>
    %cst_27 = arith.constant dense<0.000000e+00> : vector<8x256xf32>
    %67 = tpu.matmul %66, %36, %cst_27 {dimension_numbers = #tpu.dot_dimension_numbers<[1], [0], [0], [1], [0, 0, 1, 1], [], []>} : vector<8x196xf32>, vector<196x256xf32>, vector<8x256xf32> -> vector<8x256xf32>
    %c33_i32 = arith.constant 33 : i32
    %68 = tpu.dynamic_rotate %67 by %c33_i32 dim 1 : vector<8x256xf32>, i32 -> vector<8x256xf32>
    %69 = arith.addf %65, %68 : vector<8x256xf32>
    %70 = vector.extract_strided_slice %34 {offsets = [64, 0], sizes = [8, 196], strides = [1, 1]} : vector<72x196xf32> to vector<8x196xf32>
    %cst_28 = arith.constant dense<0.000000e+00> : vector<8x256xf32>
    %71 = tpu.matmul %70, %36, %cst_28 {dimension_numbers = #tpu.dot_dimension_numbers<[1], [0], [0], [1], [0, 0, 1, 1], [], []>} : vector<8x196xf32>, vector<196x256xf32>, vector<8x256xf32> -> vector<8x256xf32>
    %c34_i32 = arith.constant 34 : i32
    %72 = tpu.dynamic_rotate %71 by %c34_i32 dim 1 : vector<8x256xf32>, i32 -> vector<8x256xf32>
    %73 = arith.addf %69, %72 : vector<8x256xf32>
    %c0_29 = arith.constant 0 : index
    %c0_30 = arith.constant 0 : index
    %74 = vector.load %arg9[%c0_29, %c0_30] : memref<8x8xf32, #tpu.memory_space<vmem>>, vector<8x8xf32>
    %cst_31 = arith.constant dense<0.000000e+00> : vector<8x256xf32>
    %75 = tpu.matmul %74, %73, %cst_31 {dimension_numbers = #tpu.dot_dimension_numbers<[1], [0], [0], [1], [0, 0, 1, 1], [], []>} : vector<8x8xf32>, vector<8x256xf32>, vector<8x256xf32> -> vector<8x256xf32>
    %c0_32 = arith.constant 0 : index
    %c0_33 = arith.constant 0 : index
    %76 = vector.load %arg10[%c0_32, %c0_33] : memref<8x1xf32, #tpu.memory_space<vmem>>, vector<8x1xf32>
    %77 = vector.broadcast %76 : vector<8x1xf32> to vector<8x256xf32>
    %78 = arith.addf %75, %77 : vector<8x256xf32>
    %79 = arith.negf %78 : vector<8x256xf32>
    %80 = math.exp %79 : vector<8x256xf32>
    %cst_34 = arith.constant 1.000000e+00 : f32
    %81 = vector.broadcast %cst_34 : f32 to vector<8x256xf32>
    %82 = arith.addf %81, %80 : vector<8x256xf32>
    %83 = arith.divf %81, %82 : vector<8x256xf32>
    %84 = arith.mulf %78, %83 : vector<8x256xf32>
    %c0_35 = arith.constant 0 : index
    %c0_36 = arith.constant 0 : index
    %85 = vector.load %arg1[%c0_35, %c0_36] : memref<4x256xf32, #tpu.memory_space<vmem>>, vector<4x256xf32>
    %c0_37 = arith.constant 0 : index
    %c0_38 = arith.constant 0 : index
    %86 = vector.load %arg2[%c0_37, %c0_38] : memref<10x256xf32, #tpu.memory_space<vmem>>, vector<10x256xf32>
    %87 = tpu.concatenate %84, %85, %86 in 0 : vector<8x256xf32>, vector<4x256xf32>, vector<10x256xf32> -> vector<22x256xf32>
    %88 = math.absf %87 : vector<22x256xf32>
    %89 = arith.negf %88 : vector<22x256xf32>
    %90 = math.exp %89 : vector<22x256xf32>
    %cst_39 = arith.constant 1.000000e+00 : f32
    %91 = vector.broadcast %cst_39 : f32 to vector<22x256xf32>
    %92 = arith.addf %91, %90 : vector<22x256xf32>
    %93 = arith.divf %91, %92 : vector<22x256xf32>
    %c0_40 = arith.constant 0 : index
    %c0_41 = arith.constant 0 : index
    %94 = vector.load %arg11[%c0_40, %c0_41] : memref<256x16xf32, #tpu.memory_space<vmem>>, vector<256x16xf32>
    %cst_42 = arith.constant dense<0.000000e+00> : vector<22x16xf32>
    %95 = tpu.matmul %93, %94, %cst_42 {dimension_numbers = #tpu.dot_dimension_numbers<[1], [0], [0], [1], [0, 0, 1, 1], [], []>} : vector<22x256xf32>, vector<256x16xf32>, vector<22x16xf32> -> vector<22x16xf32>
    %c0_43 = arith.constant 0 : index
    %c0_44 = arith.constant 0 : index
    %96 = vector.load %arg12[%c0_43, %c0_44] : memref<1x1xf32, #tpu.memory_space<vmem>>, vector<1x1xf32>
    %97 = vector.broadcast %96 : vector<1x1xf32> to vector<22x16xf32>
    %98 = arith.addf %95, %97 : vector<22x16xf32>
    %c0_45 = arith.constant 0 : index
    %c0_46 = arith.constant 0 : index
    %99 = vector.load %arg13[%c0_45, %c0_46] : memref<22x16xf32, #tpu.memory_space<vmem>>, vector<22x16xf32>
    tpu.vector_store %arg13[%c0_45, %c0_46], %98 {strides = array<i32>} : memref<22x16xf32, #tpu.memory_space<vmem>>, vector<22x16xf32>,
    return
  }
}

</mosaic_0001>

<llo_original>
// kernel: model3_forward.1
$region0: #{model3_forward.1}
  #allocation0 [shape = 'u32[]', space=smem, size = 0x4, offset = 0x4, fixed_abs, tag = 'smem constant byte address 0x4 - core index']
  #allocation1 [shape = 'u32[144,128]{1,0:T(1,128)}', space=vmem, size = 0x12000, scoped, tag = 'internal scratch']
  #allocation2 [shape = 'f32[1,1]{1,0:T(1,128)S(1)}', space=vmem, size = 0x200, scoped, tag = 'scoped memory for model3_forward.1']
  %s0 = inlined_call_operand.vmem [shape: f32[8,64], index: 0, kind: input, shape index: {}]
  %s1 = inlined_call_operand.vmem [shape: f32[4,256], index: 1, kind: input, shape index: {}]
  %s2 = inlined_call_operand.vmem [shape: f32[10,256], index: 2, kind: input, shape index: {}]
  %s3 = inlined_call_operand.vmem [shape: f32[32,8], index: 3, kind: input, shape index: {}]
  %s4 = inlined_call_operand.vmem [shape: bf16[4,64,196], index: 4, kind: input, shape index: {}]
  %s5 = inlined_call_operand.vmem [shape: f32[8,1], index: 5, kind: input, shape index: {}]
  %s6 = inlined_call_operand.vmem [shape: f32[72,8], index: 6, kind: input, shape index: {}]
  %s7 = inlined_call_operand.vmem [shape: bf16[196,256], index: 7, kind: input, shape index: {}]
  %s8 = inlined_call_operand.vmem [shape: f32[8,1], index: 8, kind: input, shape index: {}]
  %s9 = inlined_call_operand.vmem [shape: f32[8,8], index: 9, kind: input, shape index: {}]
  %s10 = inlined_call_operand.vmem [shape: f32[8,1], index: 10, kind: input, shape index: {}]
  %s11 = inlined_call_operand.vmem [shape: f32[256,16], index: 11, kind: input, shape index: {}]
  %s12 = inlined_call_operand.<no memory space> [shape: f32[1,1], index: 12, kind: input, shape index: {}]
  %s13 = inlined_call_operand.vmem [shape: f32[22,16], index: 13, kind: output, shape index: {}]
  %s14 = sld [smem:[#allocation0]]
  $region62: #{model3_forward.1} parent=0
    _
  %s16 = ssub.s32 1, %s14
  %s17 = scalar_select 0, %s16, %s14
  %v18 = vstv %s12
  %19 = vst [vmem:[#allocation2] sm:$0x1] %v18
  // Predicated region
  $region2: #{model3_forward.1} parent=0 // pred_check
    _
  $region3: #{model3_forward.1} parent=0 // pred_check_branch
    %21 = sbr.rel (0) target = $region5
  $region4: #{model3_forward.1} parent=0 // pred_region
    _
  $region5: #{model3_forward.1} parent=0 // pred_fallthru
    _
  // Predicated region
  $region6: #{model3_forward.1} parent=0 // pred_check
    _
  $region7: #{model3_forward.1} parent=0 // pred_check_branch
    %23 = sbr.rel (0) target = $region9
  $region8: #{model3_forward.1} parent=0 // pred_region
    _
  $region9: #{model3_forward.1} parent=0 // pred_fallthru
    _
  // Predicated region
  $region10: #{model3_forward.1} parent=0 // pred_check
    _
  $region11: #{model3_forward.1} parent=0 // pred_check_branch
    %25 = sbr.rel (0) target = $region13
  $region12: #{model3_forward.1} parent=0 // pred_region
    _
  $region13: #{model3_forward.1} parent=0 // pred_fallthru
    _
  // Predicated region
  $region14: #{model3_forward.1} parent=0 // pred_check
    _
  $region15: #{model3_forward.1} parent=0 // pred_check_branch
    %27 = sbr.rel (0) target = $region17
  $region16: #{model3_forward.1} parent=0 // pred_region
    _
  $region17: #{model3_forward.1} parent=0 // pred_fallthru
    _
  // Predicated region
  $region18: #{model3_forward.1} parent=0 // pred_check
    _
  $region19: #{model3_forward.1} parent=0 // pred_check_branch
    %29 = sbr.rel (0) target = $region21
  $region20: #{model3_forward.1} parent=0 // pred_region
    _
  $region21: #{model3_forward.1} parent=0 // pred_fallthru
    _
  // Predicated region
  $region22: #{model3_forward.1} parent=0 // pred_check
    _
  $region23: #{model3_forward.1} parent=0 // pred_check_branch
    %31 = sbr.rel (0) target = $region25
  $region24: #{model3_forward.1} parent=0 // pred_region
    _
  $region25: #{model3_forward.1} parent=0 // pred_fallthru
    _
  // Predicated region
  $region26: #{model3_forward.1} parent=0 // pred_check
    _
  $region27: #{model3_forward.1} parent=0 // pred_check_branch
    %33 = sbr.rel (0) target = $region29
  $region28: #{model3_forward.1} parent=0 // pred_region
    _
  $region29: #{model3_forward.1} parent=0 // pred_fallthru
    _
  // Predicated region
  $region30: #{model3_forward.1} parent=0 // pred_check
    _
  $region31: #{model3_forward.1} parent=0 // pred_check_branch
    %35 = sbr.rel (0) target = $region33
  $region32: #{model3_forward.1} parent=0 // pred_region
    _
  $region33: #{model3_forward.1} parent=0 // pred_fallthru
    _
  // Predicated region
  $region34: #{model3_forward.1} parent=0 // pred_check
    _
  $region35: #{model3_forward.1} parent=0 // pred_check_branch
    %37 = sbr.rel (0) target = $region37
  $region36: #{model3_forward.1} parent=0 // pred_region
    _
  $region37: #{model3_forward.1} parent=0 // pred_fallthru
    _
  // Predicated region
  $region38: #{model3_forward.1} parent=0 // pred_check
    _
  $region39: #{model3_forward.1} parent=0 // pred_check_branch
    %39 = sbr.rel (0) target = $region41
  $region40: #{model3_forward.1} parent=0 // pred_region
    _
  $region41: #{model3_forward.1} parent=0 // pred_fallthru
    _
  // Predicated region
  $region42: #{model3_forward.1} parent=0 // pred_check
    _
  $region43: #{model3_forward.1} parent=0 // pred_check_branch
    %41 = sbr.rel (0) target = $region45
  $region44: #{model3_forward.1} parent=0 // pred_region
    _
  $region45: #{model3_forward.1} parent=0 // pred_fallthru
    _
  // Predicated region
  $region46: #{model3_forward.1} parent=0 // pred_check
    _
  $region47: #{model3_forward.1} parent=0 // pred_check_branch
    %43 = sbr.rel (0) target = $region49
  $region48: #{model3_forward.1} parent=0 // pred_region
    _
  $region49: #{model3_forward.1} parent=0 // pred_fallthru
    _
  // Predicated region
  $region50: #{model3_forward.1} parent=0 // pred_check
    _
  $region51: #{model3_forward.1} parent=0 // pred_check_branch
    %45 = sbr.rel (0) target = $region53
  $region52: #{model3_forward.1} parent=0 // pred_region
    _
  $region53: #{model3_forward.1} parent=0 // pred_fallthru
    _
  %v46 = vld [vmem:[%s3] sm:$0xff]
  %v47 = vld [vmem:[%s3 + $0x8] sm:$0xff]
  %v48 = vld [vmem:[%s3 + $0x10] sm:$0xff]
  %v49 = vld [vmem:[%s3 + $0x18] sm:$0xff]
  %v50 = vld [vmem:[%s0] sm:$0xff]
  %vm51 = vcmask 64512
  %v53 = vsel %vm51, %v46, 0
  %v56 = vsel %vm51, %v47, 0
  %v59 = vsel %vm51, %v48, 0
  %v62 = vsel %vm51, %v49, 0
  %64 = vmatprep.subr.mxu0 0.0
  %65 = vmatpush1.msra.mxu0 %v50
  %66 = vmatprep.subr.mxu0 0.0
  %67 = vmatpush1.msra.mxu0 0.0
  %68 = vmatprep.subr.mxu0 0.0
  %69 = vmatpush1.msra.mxu0 0.0
  %70 = vmatprep.subr.mxu0 0.0
  %71 = vmatpush1.msra.mxu0 0.0
  %72 = vmatprep.subr.mxu0 0.0
  %73 = vmatpush1.msra.mxu0 0.0
  %74 = vmatprep.subr.mxu0 0.0
  %75 = vmatpush1.msra.mxu0 0.0
  %76 = vmatprep.subr.mxu0 0.0
  %77 = vmatpush1.msra.mxu0 0.0
  %78 = vmatprep.subr.mxu0 0.0
  %79 = vmatpush1.msra.mxu0 0.0
  %80 = vmatprep.subr.mxu0 0.0
  %81 = vmatpush1.msra.mxu0 0.0
  %82 = vmatprep.subr.mxu0 0.0
  %83 = vmatpush1.msra.mxu0 0.0
  %84 = vmatprep.subr.mxu0 0.0
  %85 = vmatpush1.msra.mxu0 0.0
  %86 = vmatprep.subr.mxu0 0.0
  %87 = vmatpush1.msra.mxu0 0.0
  %88 = vmatprep.subr.mxu0 0.0
  %89 = vmatpush1.msra.mxu0 0.0
  %90 = vmatprep.subr.mxu0 0.0
  %91 = vmatpush1.msra.mxu0 0.0
  %92 = vmatprep.subr.mxu0 0.0
  %93 = vmatpush1.msra.mxu0 0.0
  %94 = vmatprep.subr.mxu0 0.0
  %95 = vmatpush1.msra.mxu0 0.0
  %96 = vmatprep.subr.mxu0 0.0
  %97 = vmatpush1.msra.mxu0 0.0
  %98 = vmatprep.subr.mxu0 0.0
  %99 = vmatpush1.msra.mxu0 0.0
  %100 = vmatprep.subr.mxu0 0.0
  %101 = vmatpush1.msra.mxu0 0.0
  %102 = vmatprep.subr.mxu0 0.0
  %103 = vmatpush1.msra.mxu0 0.0
  %104 = vmatprep.subr.mxu0 0.0
  %105 = vmatpush1.msra.mxu0 0.0
  %106 = vmatprep.subr.mxu0 0.0
  %107 = vmatpush1.msra.mxu0 0.0
  %108 = vmatprep.subr.mxu0 0.0
  %109 = vmatpush1.msra.mxu0 0.0
  %110 = vmatprep.subr.mxu0 0.0
  %111 = vmatpush1.msra.mxu0 0.0
  %112 = vmatprep.subr.mxu0 0.0
  %113 = vmatpush1.msra.mxu0 0.0
  %114 = vmatprep.subr.mxu0 0.0
  %115 = vmatpush1.msra.mxu0 0.0
  %116 = vmatprep.subr.mxu0 0.0
  %117 = vmatpush1.msra.mxu0 0.0
  %118 = vmatprep.subr.mxu0 0.0
  %119 = vmatpush1.msra.mxu0 0.0
  %120 = vmatprep.subr.mxu0 0.0
  %121 = vmatpush1.msra.mxu0 0.0
  %122 = vmatprep.subr.mxu0 0.0
  %123 = vmatpush1.msra.mxu0 0.0
  %124 = vmatprep.subr.mxu0 0.0
  %125 = vmatpush1.msra.mxu0 0.0
  %126 = vmatprep.subr.mxu0 0.0
  %127 = vmatpush1.msra.mxu0 0.0
  %128 = vmatprep.mubr.f32.mxu0 0.0
  %129 = vmatmul.mubr.f32.gmra.mrb[0].mxu0 %v53
  %v130 = vpop.f32.mrb[0].mxu0
  %v131 = vadd.f32 0.0, %v130
  %v132 = vpop.f32.mrb[0].mxu0
  %133 = vmatprep.mubr.f32.mxu0 0.0
  %134 = vmatmul.mubr.f32.gmra.mrb[0].mxu0 %v56
  %v135 = vpop.f32.mrb[0].mxu0
  %v136 = vadd.f32 0.0, %v135
  %v137 = vpop.f32.mrb[0].mxu0
  %138 = vmatprep.mubr.f32.mxu0 0.0
  %139 = vmatmul.mubr.f32.gmra.mrb[0].mxu0 %v59
  %v140 = vpop.f32.mrb[0].mxu0
  %v141 = vadd.f32 0.0, %v140
  %v142 = vpop.f32.mrb[0].mxu0
  %143 = vmatprep.mubr.f32.mxu0 0.0
  %144 = vmatmul.mubr.f32.gmra.mrb[0].mxu0 %v62
  %v145 = vpop.f32.mrb[0].mxu0
  %v146 = vadd.f32 0.0, %v145
  %v147 = vpop.f32.mrb[0].mxu0
  %148 = vdwg.mxu0
  %v149 = vld [vmem:[%s4] sm:$0xff]
  %v150 = vld [vmem:[%s4 + $0x8] sm:$0xff]
  %v151 = vld [vmem:[%s4 + $0x10] sm:$0xff]
  %v152 = vld [vmem:[%s4 + $0x18] sm:$0xff]
  %v153 = vld [vmem:[%s4 + $0x20] sm:$0xff]
  %v154 = vld [vmem:[%s4 + $0x28] sm:$0xff]
  %v155 = vld [vmem:[%s4 + $0x30] sm:$0xff]
  %v156 = vld [vmem:[%s4 + $0x38] sm:$0xff]
  %v157 = vld [vmem:[%s4 + $0x40] sm:$0xff]
  %v158 = vld [vmem:[%s4 + $0x48] sm:$0xff]
  %v159 = vld [vmem:[%s4 + $0x50] sm:$0xff]
  %v160 = vld [vmem:[%s4 + $0x58] sm:$0xff]
  %v161 = vld [vmem:[%s4 + $0x60] sm:$0xff]
  %v162 = vld [vmem:[%s4 + $0x68] sm:$0xff]
  %v163 = vld [vmem:[%s4 + $0x70] sm:$0xff]
  %v164 = vld [vmem:[%s4 + $0x78] sm:$0xff]
  %v165 = vld [vmem:[%s4 + $0x80] sm:$0xff]
  %v166 = vld [vmem:[%s4 + $0x88] sm:$0xff]
  %v167 = vld [vmem:[%s4 + $0x90] sm:$0xff]
  %v168 = vld [vmem:[%s4 + $0x98] sm:$0xff]
  %v169 = vld [vmem:[%s4 + $0xa0] sm:$0xff]
  %v170 = vld [vmem:[%s4 + $0xa8] sm:$0xff]
  %v171 = vld [vmem:[%s4 + $0xb0] sm:$0xff]
  %v172 = vld [vmem:[%s4 + $0xb8] sm:$0xff]
  %v173 = vld [vmem:[%s4 + $0xc0] sm:$0xff]
  %v174 = vld [vmem:[%s4 + $0xc8] sm:$0xff]
  %v175 = vld [vmem:[%s4 + $0xd0] sm:$0xff]
  %v176 = vld [vmem:[%s4 + $0xd8] sm:$0xff]
  %v177 = vld [vmem:[%s4 + $0xe0] sm:$0xff]
  %v178 = vld [vmem:[%s4 + $0xe8] sm:$0xff]
  %v179 = vld [vmem:[%s4 + $0xf0] sm:$0xff]
  %v180 = vld [vmem:[%s4 + $0xf8] sm:$0xff]
  %v181 = vunpack.c.l.bf16 %v149
  %v182 = vunpack.c.h.bf16 %v149
  %v183 = vunpack.c.l.bf16 %v150
  %v184 = vunpack.c.h.bf16 %v150
  %v185 = vunpack.c.l.bf16 %v151
  %v186 = vunpack.c.h.bf16 %v151
  %v187 = vunpack.c.l.bf16 %v152
  %v188 = vunpack.c.h.bf16 %v152
  %v189 = vunpack.c.l.bf16 %v153
  %v190 = vunpack.c.h.bf16 %v153
  %v191 = vunpack.c.l.bf16 %v154
  %v192 = vunpack.c.h.bf16 %v154
  %v193 = vunpack.c.l.bf16 %v155
  %v194 = vunpack.c.h.bf16 %v155
  %v195 = vunpack.c.l.bf16 %v156
  %v196 = vunpack.c.h.bf16 %v156
  %v197 = vunpack.c.l.bf16 %v157
  %v198 = vunpack.c.h.bf16 %v157
  %v199 = vunpack.c.l.bf16 %v158
  %v200 = vunpack.c.h.bf16 %v158
  %v201 = vunpack.c.l.bf16 %v159
  %v202 = vunpack.c.h.bf16 %v159
  %v203 = vunpack.c.l.bf16 %v160
  %v204 = vunpack.c.h.bf16 %v160
  %v205 = vunpack.c.l.bf16 %v161
  %v206 = vunpack.c.h.bf16 %v161
  %v207 = vunpack.c.l.bf16 %v162
  %v208 = vunpack.c.h.bf16 %v162
  %v209 = vunpack.c.l.bf16 %v163
  %v210 = vunpack.c.h.bf16 %v163
  %v211 = vunpack.c.l.bf16 %v164
  %v212 = vunpack.c.h.bf16 %v164
  %v213 = vunpack.c.l.bf16 %v165
  %v214 = vunpack.c.h.bf16 %v165
  %v215 = vunpack.c.l.bf16 %v166
  %v216 = vunpack.c.h.bf16 %v166
  %v217 = vunpack.c.l.bf16 %v167
  %v218 = vunpack.c.h.bf16 %v167
  %v219 = vunpack.c.l.bf16 %v168
  %v220 = vunpack.c.h.bf16 %v168
  %v221 = vunpack.c.l.bf16 %v169
  %v222 = vunpack.c.h.bf16 %v169
  %v223 = vunpack.c.l.bf16 %v170
  %v224 = vunpack.c.h.bf16 %v170
  %v225 = vunpack.c.l.bf16 %v171
  %v226 = vunpack.c.h.bf16 %v171
  %v227 = vunpack.c.l.bf16 %v172
  %v228 = vunpack.c.h.bf16 %v172
  %v229 = vunpack.c.l.bf16 %v173
  %v230 = vunpack.c.h.bf16 %v173
  %v231 = vunpack.c.l.bf16 %v174
  %v232 = vunpack.c.h.bf16 %v174
  %v233 = vunpack.c.l.bf16 %v175
  %v234 = vunpack.c.h.bf16 %v175
  %v235 = vunpack.c.l.bf16 %v176
  %v236 = vunpack.c.h.bf16 %v176
  %v237 = vunpack.c.l.bf16 %v177
  %v238 = vunpack.c.h.bf16 %v177
  %v239 = vunpack.c.l.bf16 %v178
  %v240 = vunpack.c.h.bf16 %v178
  %v241 = vunpack.c.l.bf16 %v179
  %v242 = vunpack.c.h.bf16 %v179
  %v243 = vunpack.c.l.bf16 %v180
  %v244 = vunpack.c.h.bf16 %v180
  %v245 = vld [vmem:[%s5] sm:$0xff]
  %vm246 = vcmask 523264
  %v248 = vsel %vm246, %v131, 0
  %250 = vmatprep.subr.mxu0 %v182
  %251 = vmatpush1.msra.mxu0 %v181
  %252 = vmatprep.subr.mxu0 %v184
  %253 = vmatpush1.msra.mxu0 %v183
  %254 = vmatprep.subr.mxu0 %v186
  %255 = vmatpush1.msra.mxu0 %v185
  %256 = vmatprep.subr.mxu0 %v188
  %257 = vmatpush1.msra.mxu0 %v187
  %258 = vmatprep.subr.mxu0 %v190
  %259 = vmatpush1.msra.mxu0 %v189
  %260 = vmatprep.subr.mxu0 %v192
  %261 = vmatpush1.msra.mxu0 %v191
  %262 = vmatprep.subr.mxu0 %v194
  %263 = vmatpush1.msra.mxu0 %v193
  %264 = vmatprep.subr.mxu0 %v196
  %265 = vmatpush1.msra.mxu0 %v195
  %266 = vmatprep.subr.mxu0 0.0
  %267 = vmatpush1.msra.mxu0 0.0
  %268 = vmatprep.subr.mxu0 0.0
  %269 = vmatpush1.msra.mxu0 0.0
  %270 = vmatprep.subr.mxu0 0.0
  %271 = vmatpush1.msra.mxu0 0.0
  %272 = vmatprep.subr.mxu0 0.0
  %273 = vmatpush1.msra.mxu0 0.0
  %274 = vmatprep.subr.mxu0 0.0
  %275 = vmatpush1.msra.mxu0 0.0
  %276 = vmatprep.subr.mxu0 0.0
  %277 = vmatpush1.msra.mxu0 0.0
  %278 = vmatprep.subr.mxu0 0.0
  %279 = vmatpush1.msra.mxu0 0.0
  %280 = vmatprep.subr.mxu0 0.0
  %281 = vmatpush1.msra.mxu0 0.0
  %282 = vmatprep.subr.mxu0 0.0
  %283 = vmatpush1.msra.mxu0 0.0
  %284 = vmatprep.subr.mxu0 0.0
  %285 = vmatpush1.msra.mxu0 0.0
  %286 = vmatprep.subr.mxu0 0.0
  %287 = vmatpush1.msra.mxu0 0.0
  %288 = vmatprep.subr.mxu0 0.0
  %289 = vmatpush1.msra.mxu0 0.0
  %290 = vmatprep.subr.mxu0 0.0
  %291 = vmatpush1.msra.mxu0 0.0
  %292 = vmatprep.subr.mxu0 0.0
  %293 = vmatpush1.msra.mxu0 0.0
  %294 = vmatprep.subr.mxu0 0.0
  %295 = vmatpush1.msra.mxu0 0.0
  %296 = vmatprep.subr.mxu0 0.0
  %297 = vmatpush1.msra.mxu0 0.0
  %298 = vmatprep.subr.mxu0 0.0
  %299 = vmatpush1.msra.mxu0 0.0
  %300 = vmatprep.subr.mxu0 0.0
  %301 = vmatpush1.msra.mxu0 0.0
  %302 = vmatprep.subr.mxu0 0.0
  %303 = vmatpush1.msra.mxu0 0.0
  %304 = vmatprep.subr.mxu0 0.0
  %305 = vmatpush1.msra.mxu0 0.0
  %306 = vmatprep.subr.mxu0 0.0
  %307 = vmatpush1.msra.mxu0 0.0
  %308 = vmatprep.subr.mxu0 0.0
  %309 = vmatpush1.msra.mxu0 0.0
  %310 = vmatprep.subr.mxu0 0.0
  %311 = vmatpush1.msra.mxu0 0.0
  %312 = vmatprep.subr.mxu0 0.0
  %313 = vmatpush1.msra.mxu0 0.0
  %314 = vmatprep.mubr.f32.mxu0 0.0
  %315 = vmatmul.mubr.f32.gmra.mrb[0].mxu0 %v248
  %v316 = vpop.f32.mrb[0].mxu0
  %v317 = vadd.f32 0.0, %v316
  %v318 = vpop.f32.mrb[0].mxu0
  %v319 = vadd.f32 0.0, %v318
  %320 = vdwg.mxu0
  %322 = vset.pattern.permute.xlu0 0
  %323 = vperm.xlu0 %322, %v245
  %v324 = vpop.permute.xlu0 %323
  %v326 = vadd.f32 %v324, %v317
  %v327 = vadd.f32 %v324, %v319
  %v329 = vsel %vm246, %v136, 0
  %331 = vmatprep.subr.mxu0 %v198
  %332 = vmatpush1.msra.mxu0 %v197
  %333 = vmatprep.subr.mxu0 %v200
  %334 = vmatpush1.msra.mxu0 %v199
  %335 = vmatprep.subr.mxu0 %v202
  %336 = vmatpush1.msra.mxu0 %v201
  %337 = vmatprep.subr.mxu0 %v204
  %338 = vmatpush1.msra.mxu0 %v203
  %339 = vmatprep.subr.mxu0 %v206
  %340 = vmatpush1.msra.mxu0 %v205
  %341 = vmatprep.subr.mxu0 %v208
  %342 = vmatpush1.msra.mxu0 %v207
  %343 = vmatprep.subr.mxu0 %v210
  %344 = vmatpush1.msra.mxu0 %v209
  %345 = vmatprep.subr.mxu0 %v212
  %346 = vmatpush1.msra.mxu0 %v211
  %347 = vmatprep.subr.mxu0 0.0
  %348 = vmatpush1.msra.mxu0 0.0
  %349 = vmatprep.subr.mxu0 0.0
  %350 = vmatpush1.msra.mxu0 0.0
  %351 = vmatprep.subr.mxu0 0.0
  %352 = vmatpush1.msra.mxu0 0.0
  %353 = vmatprep.subr.mxu0 0.0
  %354 = vmatpush1.msra.mxu0 0.0
  %355 = vmatprep.subr.mxu0 0.0
  %356 = vmatpush1.msra.mxu0 0.0
  %357 = vmatprep.subr.mxu0 0.0
  %358 = vmatpush1.msra.mxu0 0.0
  %359 = vmatprep.subr.mxu0 0.0
  %360 = vmatpush1.msra.mxu0 0.0
  %361 = vmatprep.subr.mxu0 0.0
  %362 = vmatpush1.msra.mxu0 0.0
  %363 = vmatprep.subr.mxu0 0.0
  %364 = vmatpush1.msra.mxu0 0.0
  %365 = vmatprep.subr.mxu0 0.0
  %366 = vmatpush1.msra.mxu0 0.0
  %367 = vmatprep.subr.mxu0 0.0
  %368 = vmatpush1.msra.mxu0 0.0
  %369 = vmatprep.subr.mxu0 0.0
  %370 = vmatpush1.msra.mxu0 0.0
  %371 = vmatprep.subr.mxu0 0.0
  %372 = vmatpush1.msra.mxu0 0.0
  %373 = vmatprep.subr.mxu0 0.0
  %374 = vmatpush1.msra.mxu0 0.0
  %375 = vmatprep.subr.mxu0 0.0
  %376 = vmatpush1.msra.mxu0 0.0
  %377 = vmatprep.subr.mxu0 0.0
  %378 = vmatpush1.msra.mxu0 0.0
  %379 = vmatprep.subr.mxu0 0.0
  %380 = vmatpush1.msra.mxu0 0.0
  %381 = vmatprep.subr.mxu0 0.0
  %382 = vmatpush1.msra.mxu0 0.0
  %383 = vmatprep.subr.mxu0 0.0
  %384 = vmatpush1.msra.mxu0 0.0
  %385 = vmatprep.subr.mxu0 0.0
  %386 = vmatpush1.msra.mxu0 0.0
  %387 = vmatprep.subr.mxu0 0.0
  %388 = vmatpush1.msra.mxu0 0.0
  %389 = vmatprep.subr.mxu0 0.0
  %390 = vmatpush1.msra.mxu0 0.0
  %391 = vmatprep.subr.mxu0 0.0
  %392 = vmatpush1.msra.mxu0 0.0
  %393 = vmatprep.subr.mxu0 0.0
  %394 = vmatpush1.msra.mxu0 0.0
  %395 = vmatprep.mubr.f32.mxu0 0.0
  %396 = vmatmul.mubr.f32.gmra.mrb[0].mxu0 %v329
  %v397 = vpop.f32.mrb[0].mxu0
  %v398 = vadd.f32 0.0, %v397
  %v399 = vpop.f32.mrb[0].mxu0
  %v400 = vadd.f32 0.0, %v399
  %401 = vdwg.mxu0
  %v402 = vadd.f32 %v326, %v398
  %v403 = vadd.f32 %v327, %v400
  %v405 = vsel %vm246, %v141, 0
  %407 = vmatprep.subr.mxu0 %v214
  %408 = vmatpush1.msra.mxu0 %v213
  %409 = vmatprep.subr.mxu0 %v216
  %410 = vmatpush1.msra.mxu0 %v215
  %411 = vmatprep.subr.mxu0 %v218
  %412 = vmatpush1.msra.mxu0 %v217
  %413 = vmatprep.subr.mxu0 %v220
  %414 = vmatpush1.msra.mxu0 %v219
  %415 = vmatprep.subr.mxu0 %v222
  %416 = vmatpush1.msra.mxu0 %v221
  %417 = vmatprep.subr.mxu0 %v224
  %418 = vmatpush1.msra.mxu0 %v223
  %419 = vmatprep.subr.mxu0 %v226
  %420 = vmatpush1.msra.mxu0 %v225
  %421 = vmatprep.subr.mxu0 %v228
  %422 = vmatpush1.msra.mxu0 %v227
  %423 = vmatprep.subr.mxu0 0.0
  %424 = vmatpush1.msra.mxu0 0.0
  %425 = vmatprep.subr.mxu0 0.0
  %426 = vmatpush1.msra.mxu0 0.0
  %427 = vmatprep.subr.mxu0 0.0
  %428 = vmatpush1.msra.mxu0 0.0
  %429 = vmatprep.subr.mxu0 0.0
  %430 = vmatpush1.msra.mxu0 0.0
  %431 = vmatprep.subr.mxu0 0.0
  %432 = vmatpush1.msra.mxu0 0.0
  %433 = vmatprep.subr.mxu0 0.0
  %434 = vmatpush1.msra.mxu0 0.0
  %435 = vmatprep.subr.mxu0 0.0
  %436 = vmatpush1.msra.mxu0 0.0
  %437 = vmatprep.subr.mxu0 0.0
  %438 = vmatpush1.msra.mxu0 0.0
  %439 = vmatprep.subr.mxu0 0.0
  %440 = vmatpush1.msra.mxu0 0.0
  %441 = vmatprep.subr.mxu0 0.0
  %442 = vmatpush1.msra.mxu0 0.0
  %443 = vmatprep.subr.mxu0 0.0
  %444 = vmatpush1.msra.mxu0 0.0
  %445 = vmatprep.subr.mxu0 0.0
  %446 = vmatpush1.msra.mxu0 0.0
  %447 = vmatprep.subr.mxu0 0.0
  %448 = vmatpush1.msra.mxu0 0.0
  %449 = vmatprep.subr.mxu0 0.0
  %450 = vmatpush1.msra.mxu0 0.0
  %451 = vmatprep.subr.mxu0 0.0
  %452 = vmatpush1.msra.mxu0 0.0
  %453 = vmatprep.subr.mxu0 0.0
  %454 = vmatpush1.msra.mxu0 0.0
  %455 = vmatprep.subr.mxu0 0.0
  %456 = vmatpush1.msra.mxu0 0.0
  %457 = vmatprep.subr.mxu0 0.0
  %458 = vmatpush1.msra.mxu0 0.0
  %459 = vmatprep.subr.mxu0 0.0
  %460 = vmatpush1.msra.mxu0 0.0
  %461 = vmatprep.subr.mxu0 0.0
  %462 = vmatpush1.msra.mxu0 0.0
  %463 = vmatprep.subr.mxu0 0.0
  %464 = vmatpush1.msra.mxu0 0.0
  %465 = vmatprep.subr.mxu0 0.0
  %466 = vmatpush1.msra.mxu0 0.0
  %467 = vmatprep.subr.mxu0 0.0
  %468 = vmatpush1.msra.mxu0 0.0
  %469 = vmatprep.subr.mxu0 0.0
  %470 = vmatpush1.msra.mxu0 0.0
  %471 = vmatprep.mubr.f32.mxu0 0.0
  %472 = vmatmul.mubr.f32.gmra.mrb[0].mxu0 %v405
  %v473 = vpop.f32.mrb[0].mxu0
  %v474 = vadd.f32 0.0, %v473
  %v475 = vpop.f32.mrb[0].mxu0
  %v476 = vadd.f32 0.0, %v475
  %477 = vdwg.mxu0
  %v478 = vadd.f32 %v402, %v474
  %v479 = vadd.f32 %v403, %v476
  %v481 = vsel %vm246, %v146, 0
  %483 = vmatprep.subr.mxu0 %v230
  %484 = vmatpush1.msra.mxu0 %v229
  %485 = vmatprep.subr.mxu0 %v232
  %486 = vmatpush1.msra.mxu0 %v231
  %487 = vmatprep.subr.mxu0 %v234
  %488 = vmatpush1.msra.mxu0 %v233
  %489 = vmatprep.subr.mxu0 %v236
  %490 = vmatpush1.msra.mxu0 %v235
  %491 = vmatprep.subr.mxu0 %v238
  %492 = vmatpush1.msra.mxu0 %v237
  %493 = vmatprep.subr.mxu0 %v240
  %494 = vmatpush1.msra.mxu0 %v239
  %495 = vmatprep.subr.mxu0 %v242
  %496 = vmatpush1.msra.mxu0 %v241
  %497 = vmatprep.subr.mxu0 %v244
  %498 = vmatpush1.msra.mxu0 %v243
  %499 = vmatprep.subr.mxu0 0.0
  %500 = vmatpush1.msra.mxu0 0.0
  %501 = vmatprep.subr.mxu0 0.0
  %502 = vmatpush1.msra.mxu0 0.0
  %503 = vmatprep.subr.mxu0 0.0
  %504 = vmatpush1.msra.mxu0 0.0
  %505 = vmatprep.subr.mxu0 0.0
  %506 = vmatpush1.msra.mxu0 0.0
  %507 = vmatprep.subr.mxu0 0.0
  %508 = vmatpush1.msra.mxu0 0.0
  %509 = vmatprep.subr.mxu0 0.0
  %510 = vmatpush1.msra.mxu0 0.0
  %511 = vmatprep.subr.mxu0 0.0
  %512 = vmatpush1.msra.mxu0 0.0
  %513 = vmatprep.subr.mxu0 0.0
  %514 = vmatpush1.msra.mxu0 0.0
  %515 = vmatprep.subr.mxu0 0.0
  %516 = vmatpush1.msra.mxu0 0.0
  %517 = vmatprep.subr.mxu0 0.0
  %518 = vmatpush1.msra.mxu0 0.0
  %519 = vmatprep.subr.mxu0 0.0
  %520 = vmatpush1.msra.mxu0 0.0
  %521 = vmatprep.subr.mxu0 0.0
  %522 = vmatpush1.msra.mxu0 0.0
  %523 = vmatprep.subr.mxu0 0.0
  %524 = vmatpush1.msra.mxu0 0.0
  %525 = vmatprep.subr.mxu0 0.0
  %526 = vmatpush1.msra.mxu0 0.0
  %527 = vmatprep.subr.mxu0 0.0
  %528 = vmatpush1.msra.mxu0 0.0
  %529 = vmatprep.subr.mxu0 0.0
  %530 = vmatpush1.msra.mxu0 0.0
  %531 = vmatprep.subr.mxu0 0.0
  %532 = vmatpush1.msra.mxu0 0.0
  %533 = vmatprep.subr.mxu0 0.0
  %534 = vmatpush1.msra.mxu0 0.0
  %535 = vmatprep.subr.mxu0 0.0
  %536 = vmatpush1.msra.mxu0 0.0
  %537 = vmatprep.subr.mxu0 0.0
  %538 = vmatpush1.msra.mxu0 0.0
  %539 = vmatprep.subr.mxu0 0.0
  %540 = vmatpush1.msra.mxu0 0.0
  %541 = vmatprep.subr.mxu0 0.0
  %542 = vmatpush1.msra.mxu0 0.0
  %543 = vmatprep.subr.mxu0 0.0
  %544 = vmatpush1.msra.mxu0 0.0
  %545 = vmatprep.subr.mxu0 0.0
  %546 = vmatpush1.msra.mxu0 0.0
  %547 = vmatprep.mubr.f32.mxu0 0.0
  %548 = vmatmul.mubr.f32.gmra.mrb[0].mxu0 %v481
  %v549 = vpop.f32.mrb[0].mxu0
  %v550 = vadd.f32 0.0, %v549
  %v551 = vpop.f32.mrb[0].mxu0
  %v552 = vadd.f32 0.0, %v551
  %553 = vdwg.mxu0
  %v554 = vadd.f32 %v478, %v550
  %v555 = vadd.f32 %v479, %v552
  %v556 = vxor.u32 %v554, 2147483648
  %v557 = vxor.u32 %v555, 2147483648
  %v558 = vmul.f32 %v556, 1.442695
  %v559 = vpow.pop %v558
  %v560 = vmul.f32 %v557, 1.442695
  %v561 = vpow.pop %v560
  %v562 = vadd.f32 %v559, 1.0
  %v563 = vadd.f32 %v561, 1.0
  %v564 = vrcp.pop %v562
  %v565 = vmul.f32 1.0, %v564
  %v566 = vrcp.pop %v563
  %v567 = vmul.f32 1.0, %v566
  %v568 = vmul.f32 %v554, %v565
  %v569 = vmul.f32 %v555, %v567
  %v570 = vld [vmem:[%s6] sm:$0xff]
  %v571 = vld [vmem:[%s6 + $0x8] sm:$0xff]
  %v572 = vld [vmem:[%s6 + $0x10] sm:$0xff]
  %v573 = vld [vmem:[%s6 + $0x18] sm:$0xff]
  %v574 = vld [vmem:[%s6 + $0x20] sm:$0xff]
  %v575 = vld [vmem:[%s6 + $0x28] sm:$0xff]
  %v576 = vld [vmem:[%s6 + $0x30] sm:$0xff]
  %v577 = vld [vmem:[%s6 + $0x38] sm:$0xff]
  %v578 = vld [vmem:[%s6 + $0x40] sm:$0xff]
  %v580 = vsel %vm51, %v570, 0
  %v583 = vsel %vm51, %v571, 0
  %v586 = vsel %vm51, %v572, 0
  %v589 = vsel %vm51, %v573, 0
  %v592 = vsel %vm51, %v574, 0
  %v595 = vsel %vm51, %v575, 0
  %v598 = vsel %vm51, %v576, 0
  %v601 = vsel %vm51, %v577, 0
  %v604 = vsel %vm51, %v578, 0
  %606 = vmatprep.subr.mxu0 %v569
  %607 = vmatpush1.msra.mxu0 %v568
  %608 = vmatprep.subr.mxu0 0.0
  %609 = vmatpush1.msra.mxu0 0.0
  %610 = vmatprep.subr.mxu0 0.0
  %611 = vmatpush1.msra.mxu0 0.0
  %612 = vmatprep.subr.mxu0 0.0
  %613 = vmatpush1.msra.mxu0 0.0
  %614 = vmatprep.subr.mxu0 0.0
  %615 = vmatpush1.msra.mxu0 0.0
  %616 = vmatprep.subr.mxu0 0.0
  %617 = vmatpush1.msra.mxu0 0.0
  %618 = vmatprep.subr.mxu0 0.0
  %619 = vmatpush1.msra.mxu0 0.0
  %620 = vmatprep.subr.mxu0 0.0
  %621 = vmatpush1.msra.mxu0 0.0
  %622 = vmatprep.subr.mxu0 0.0
  %623 = vmatpush1.msra.mxu0 0.0
  %624 = vmatprep.subr.mxu0 0.0
  %625 = vmatpush1.msra.mxu0 0.0
  %626 = vmatprep.subr.mxu0 0.0
  %627 = vmatpush1.msra.mxu0 0.0
  %628 = vmatprep.subr.mxu0 0.0
  %629 = vmatpush1.msra.mxu0 0.0
  %630 = vmatprep.subr.mxu0 0.0
  %631 = vmatpush1.msra.mxu0 0.0
  %632 = vmatprep.subr.mxu0 0.0
  %633 = vmatpush1.msra.mxu0 0.0
  %634 = vmatprep.subr.mxu0 0.0
  %635 = vmatpush1.msra.mxu0 0.0
  %636 = vmatprep.subr.mxu0 0.0
  %637 = vmatpush1.msra.mxu0 0.0
  %638 = vmatprep.subr.mxu0 0.0
  %639 = vmatpush1.msra.mxu0 0.0
  %640 = vmatprep.subr.mxu0 0.0
  %641 = vmatpush1.msra.mxu0 0.0
  %642 = vmatprep.subr.mxu0 0.0
  %643 = vmatpush1.msra.mxu0 0.0
  %644 = vmatprep.subr.mxu0 0.0
  %645 = vmatpush1.msra.mxu0 0.0
  %646 = vmatprep.subr.mxu0 0.0
  %647 = vmatpush1.msra.mxu0 0.0
  %648 = vmatprep.subr.mxu0 0.0
  %649 = vmatpush1.msra.mxu0 0.0
  %650 = vmatprep.subr.mxu0 0.0
  %651 = vmatpush1.msra.mxu0 0.0
  %652 = vmatprep.subr.mxu0 0.0
  %653 = vmatpush1.msra.mxu0 0.0
  %654 = vmatprep.subr.mxu0 0.0
  %655 = vmatpush1.msra.mxu0 0.0
  %656 = vmatprep.subr.mxu0 0.0
  %657 = vmatpush1.msra.mxu0 0.0
  %658 = vmatprep.subr.mxu0 0.0
  %659 = vmatpush1.msra.mxu0 0.0
  %660 = vmatprep.subr.mxu0 0.0
  %661 = vmatpush1.msra.mxu0 0.0
  %662 = vmatprep.subr.mxu0 0.0
  %663 = vmatpush1.msra.mxu0 0.0
  %664 = vmatprep.subr.mxu0 0.0
  %665 = vmatpush1.msra.mxu0 0.0
  %666 = vmatprep.subr.mxu0 0.0
  %667 = vmatpush1.msra.mxu0 0.0
  %668 = vmatprep.subr.mxu0 0.0
  %669 = vmatpush1.msra.mxu0 0.0
  %670 = vmatprep.mubr.f32.mxu0 0.0
  %671 = vmatmul.mubr.f32.gmra.mrb[0].mxu0 %v580
  %v672 = vpop.f32.mrb[0].mxu0
  %v673 = vadd.f32 0.0, %v672
  %v674 = vpop.f32.mrb[0].mxu0
  %v675 = vadd.f32 0.0, %v674
  %676 = vmatprep.mubr.f32.mxu0 0.0
  %677 = vmatmul.mubr.f32.gmra.mrb[0].mxu0 %v583
  %v678 = vpop.f32.mrb[0].mxu0
  %v679 = vadd.f32 0.0, %v678
  %v680 = vpop.f32.mrb[0].mxu0
  %v681 = vadd.f32 0.0, %v680
  %682 = vmatprep.mubr.f32.mxu0 0.0
  %683 = vmatmul.mubr.f32.gmra.mrb[0].mxu0 %v586
  %v684 = vpop.f32.mrb[0].mxu0
  %v685 = vadd.f32 0.0, %v684
  %v686 = vpop.f32.mrb[0].mxu0
  %v687 = vadd.f32 0.0, %v686
  %688 = vmatprep.mubr.f32.mxu0 0.0
  %689 = vmatmul.mubr.f32.gmra.mrb[0].mxu0 %v589
  %v690 = vpop.f32.mrb[0].mxu0
  %v691 = vadd.f32 0.0, %v690
  %v692 = vpop.f32.mrb[0].mxu0
  %v693 = vadd.f32 0.0, %v692
  %694 = vmatprep.mubr.f32.mxu0 0.0
  %695 = vmatmul.mubr.f32.gmra.mrb[0].mxu0 %v592
  %v696 = vpop.f32.mrb[0].mxu0
  %v697 = vadd.f32 0.0, %v696
  %v698 = vpop.f32.mrb[0].mxu0
  %v699 = vadd.f32 0.0, %v698
  %700 = vmatprep.mubr.f32.mxu0 0.0
  %701 = vmatmul.mubr.f32.gmra.mrb[0].mxu0 %v595
  %v702 = vpop.f32.mrb[0].mxu0
  %v703 = vadd.f32 0.0, %v702
  %v704 = vpop.f32.mrb[0].mxu0
  %v705 = vadd.f32 0.0, %v704
  %706 = vmatprep.mubr.f32.mxu0 0.0
  %707 = vmatmul.mubr.f32.gmra.mrb[0].mxu0 %v598
  %v708 = vpop.f32.mrb[0].mxu0
  %v709 = vadd.f32 0.0, %v708
  %v710 = vpop.f32.mrb[0].mxu0
  %v711 = vadd.f32 0.0, %v710
  %712 = vmatprep.mubr.f32.mxu0 0.0
  %713 = vmatmul.mubr.f32.gmra.mrb[0].mxu0 %v601
  %v714 = vpop.f32.mrb[0].mxu0
  %v715 = vadd.f32 0.0, %v714
  %v716 = vpop.f32.mrb[0].mxu0
  %v717 = vadd.f32 0.0, %v716
  %718 = vmatprep.mubr.f32.mxu0 0.0
  %719 = vmatmul.mubr.f32.gmra.mrb[0].mxu0 %v604
  %v720 = vpop.f32.mrb[0].mxu0
  %v721 = vadd.f32 0.0, %v720
  %v722 = vpop.f32.mrb[0].mxu0
  %v723 = vadd.f32 0.0, %v722
  %724 = vdwg.mxu0
  %v725 = vld [vmem:[%s7] sm:$0xff]
  %v726 = vld [vmem:[%s7 + $0x8] sm:$0xff]
  %v727 = vld [vmem:[%s7 + $0x10] sm:$0xff]
  %v728 = vld [vmem:[%s7 + $0x18] sm:$0xff]
  %v729 = vld [vmem:[%s7 + $0x20] sm:$0xff]
  %v730 = vld [vmem:[%s7 + $0x28] sm:$0xff]
  %v731 = vld [vmem:[%s7 + $0x30] sm:$0xff]
  %v732 = vld [vmem:[%s7 + $0x38] sm:$0xff]
  %v733 = vld [vmem:[%s7 + $0x40] sm:$0xff]
  %v734 = vld [vmem:[%s7 + $0x48] sm:$0xff]
  %v735 = vld [vmem:[%s7 + $0x50] sm:$0xff]
  %v736 = vld [vmem:[%s7 + $0x58] sm:$0xff]
  %v737 = vld [vmem:[%s7 + $0x60] sm:$0xff]
  %v738 = vld [vmem:[%s7 + $0x68] sm:$0xff]
  %v739 = vld [vmem:[%s7 + $0x70] sm:$0xff]
  %v740 = vld [vmem:[%s7 + $0x78] sm:$0xff]
  %v741 = vld [vmem:[%s7 + $0x80] sm:$0xff]
  %v742 = vld [vmem:[%s7 + $0x88] sm:$0xff]
  %v743 = vld [vmem:[%s7 + $0x90] sm:$0xff]
  %v744 = vld [vmem:[%s7 + $0x98] sm:$0xff]
  %v745 = vld [vmem:[%s7 + $0xa0] sm:$0xff]
  %v746 = vld [vmem:[%s7 + $0xa8] sm:$0xff]
  %v747 = vld [vmem:[%s7 + $0xb0] sm:$0xff]
  %v748 = vld [vmem:[%s7 + $0xb8] sm:$0xff]
  %v749 = vld [vmem:[%s7 + $0xc0] sm:$0x33]
  %v750 = vunpack.c.l.bf16 %v725
  %v751 = vunpack.c.h.bf16 %v725
  %v752 = vunpack.c.l.bf16 %v726
  %v753 = vunpack.c.h.bf16 %v726
  %v754 = vunpack.c.l.bf16 %v727
  %v755 = vunpack.c.h.bf16 %v727
  %v756 = vunpack.c.l.bf16 %v728
  %v757 = vunpack.c.h.bf16 %v728
  %v758 = vunpack.c.l.bf16 %v729
  %v759 = vunpack.c.h.bf16 %v729
  %v760 = vunpack.c.l.bf16 %v730
  %v761 = vunpack.c.h.bf16 %v730
  %v762 = vunpack.c.l.bf16 %v731
  %v763 = vunpack.c.h.bf16 %v731
  %v764 = vunpack.c.l.bf16 %v732
  %v765 = vunpack.c.h.bf16 %v732
  %v766 = vunpack.c.l.bf16 %v733
  %v767 = vunpack.c.h.bf16 %v733
  %v768 = vunpack.c.l.bf16 %v734
  %v769 = vunpack.c.h.bf16 %v734
  %v770 = vunpack.c.l.bf16 %v735
  %v771 = vunpack.c.h.bf16 %v735
  %v772 = vunpack.c.l.bf16 %v736
  %v773 = vunpack.c.h.bf16 %v736
  %v774 = vunpack.c.l.bf16 %v737
  %v775 = vunpack.c.h.bf16 %v737
  %v776 = vunpack.c.l.bf16 %v738
  %v777 = vunpack.c.h.bf16 %v738
  %v778 = vunpack.c.l.bf16 %v739
  %v779 = vunpack.c.h.bf16 %v739
  %v780 = vunpack.c.l.bf16 %v740
  %v781 = vunpack.c.h.bf16 %v740
  %v782 = vunpack.c.l.bf16 %v741
  %v783 = vunpack.c.h.bf16 %v741
  %v784 = vunpack.c.l.bf16 %v742
  %v785 = vunpack.c.h.bf16 %v742
  %v786 = vunpack.c.l.bf16 %v743
  %v787 = vunpack.c.h.bf16 %v743
  %v788 = vunpack.c.l.bf16 %v744
  %v789 = vunpack.c.h.bf16 %v744
  %v790 = vunpack.c.l.bf16 %v745
  %v791 = vunpack.c.h.bf16 %v745
  %v792 = vunpack.c.l.bf16 %v746
  %v793 = vunpack.c.h.bf16 %v746
  %v794 = vunpack.c.l.bf16 %v747
  %v795 = vunpack.c.h.bf16 %v747
  %v796 = vunpack.c.l.bf16 %v748
  %v797 = vunpack.c.h.bf16 %v748
  %v798 = vunpack.c.l.bf16 %v749
  %v799 = vunpack.c.h.bf16 %v749
  %v800 = vld [vmem:[%s8] sm:$0xff]
  %vm801 = vcmask 556032
  %v803 = vsel %vm801, %v675, 0
  %vm805 = vcmask 1043456
  %v807 = vsel %vm805, %v798, 0
  %v810 = vsel %vm805, %v799, 0
  %812 = vmatprep.subr.mxu0 %v751
  %813 = vmatpush1.msra.mxu0 %v750
  %814 = vmatprep.subr.mxu0 %v753
  %815 = vmatpush1.msra.mxu0 %v752
  %816 = vmatprep.subr.mxu0 %v755
  %817 = vmatpush1.msra.mxu0 %v754
  %818 = vmatprep.subr.mxu0 %v757
  %819 = vmatpush1.msra.mxu0 %v756
  %820 = vmatprep.subr.mxu0 %v759
  %821 = vmatpush1.msra.mxu0 %v758
  %822 = vmatprep.subr.mxu0 %v761
  %823 = vmatpush1.msra.mxu0 %v760
  %824 = vmatprep.subr.mxu0 %v763
  %825 = vmatpush1.msra.mxu0 %v762
  %826 = vmatprep.subr.mxu0 %v765
  %827 = vmatpush1.msra.mxu0 %v764
  %828 = vmatprep.subr.mxu0 %v767
  %829 = vmatpush1.msra.mxu0 %v766
  %830 = vmatprep.subr.mxu0 %v769
  %831 = vmatpush1.msra.mxu0 %v768
  %832 = vmatprep.subr.mxu0 %v771
  %833 = vmatpush1.msra.mxu0 %v770
  %834 = vmatprep.subr.mxu0 %v773
  %835 = vmatpush1.msra.mxu0 %v772
  %836 = vmatprep.subr.mxu0 %v775
  %837 = vmatpush1.msra.mxu0 %v774
  %838 = vmatprep.subr.mxu0 %v777
  %839 = vmatpush1.msra.mxu0 %v776
  %840 = vmatprep.subr.mxu0 %v779
  %841 = vmatpush1.msra.mxu0 %v778
  %842 = vmatprep.subr.mxu0 %v781
  %843 = vmatpush1.msra.mxu0 %v780
  %844 = vmatprep.subr.mxu0 %v783
  %845 = vmatpush1.msra.mxu0 %v782
  %846 = vmatprep.subr.mxu0 %v785
  %847 = vmatpush1.msra.mxu0 %v784
  %848 = vmatprep.subr.mxu0 %v787
  %849 = vmatpush1.msra.mxu0 %v786
  %850 = vmatprep.subr.mxu0 %v789
  %851 = vmatpush1.msra.mxu0 %v788
  %852 = vmatprep.subr.mxu0 %v791
  %853 = vmatpush1.msra.mxu0 %v790
  %854 = vmatprep.subr.mxu0 %v793
  %855 = vmatpush1.msra.mxu0 %v792
  %856 = vmatprep.subr.mxu0 %v795
  %857 = vmatpush1.msra.mxu0 %v794
  %858 = vmatprep.subr.mxu0 %v797
  %859 = vmatpush1.msra.mxu0 %v796
  %860 = vmatprep.subr.mxu0 %v810
  %861 = vmatpush1.msra.mxu0 %v807
  %862 = vmatprep.subr.mxu0 0.0
  %863 = vmatpush1.msra.mxu0 0.0
  %864 = vmatprep.subr.mxu0 0.0
  %865 = vmatpush1.msra.mxu0 0.0
  %866 = vmatprep.subr.mxu0 0.0
  %867 = vmatpush1.msra.mxu0 0.0
  %868 = vmatprep.subr.mxu0 0.0
  %869 = vmatpush1.msra.mxu0 0.0
  %870 = vmatprep.subr.mxu0 0.0
  %871 = vmatpush1.msra.mxu0 0.0
  %872 = vmatprep.subr.mxu0 0.0
  %873 = vmatpush1.msra.mxu0 0.0
  %874 = vmatprep.subr.mxu0 0.0
  %875 = vmatpush1.msra.mxu0 0.0
  %876 = vmatprep.mubr.f32.mxu0 %v803
  %877 = vmatmul.mubr.f32.gmra.mrb[0].mxu0 %v673
  %v878 = vpop.f32.mrb[0].mxu0
  %v879 = vadd.f32 0.0, %v878
  %v880 = vpop.f32.mrb[0].mxu0
  %v881 = vadd.f32 0.0, %v880
  %882 = vdwg.mxu0
  %884 = vset.pattern.permute.xlu0 0
  %885 = vperm.xlu0 %884, %v800
  %v886 = vpop.permute.xlu0 %885
  %v888 = vadd.f32 %v886, %v879
  %v889 = vadd.f32 %v886, %v881
  %v891 = vsel %vm801, %v681, 0
  %893 = vmatprep.subr.mxu0 %v751
  %894 = vmatpush1.msra.mxu0 %v750
  %895 = vmatprep.subr.mxu0 %v753
  %896 = vmatpush1.msra.mxu0 %v752
  %897 = vmatprep.subr.mxu0 %v755
  %898 = vmatpush1.msra.mxu0 %v754
  %899 = vmatprep.subr.mxu0 %v757
  %900 = vmatpush1.msra.mxu0 %v756
  %901 = vmatprep.subr.mxu0 %v759
  %902 = vmatpush1.msra.mxu0 %v758
  %903 = vmatprep.subr.mxu0 %v761
  %904 = vmatpush1.msra.mxu0 %v760
  %905 = vmatprep.subr.mxu0 %v763
  %906 = vmatpush1.msra.mxu0 %v762
  %907 = vmatprep.subr.mxu0 %v765
  %908 = vmatpush1.msra.mxu0 %v764
  %909 = vmatprep.subr.mxu0 %v767
  %910 = vmatpush1.msra.mxu0 %v766
  %911 = vmatprep.subr.mxu0 %v769
  %912 = vmatpush1.msra.mxu0 %v768
  %913 = vmatprep.subr.mxu0 %v771
  %914 = vmatpush1.msra.mxu0 %v770
  %915 = vmatprep.subr.mxu0 %v773
  %916 = vmatpush1.msra.mxu0 %v772
  %917 = vmatprep.subr.mxu0 %v775
  %918 = vmatpush1.msra.mxu0 %v774
  %919 = vmatprep.subr.mxu0 %v777
  %920 = vmatpush1.msra.mxu0 %v776
  %921 = vmatprep.subr.mxu0 %v779
  %922 = vmatpush1.msra.mxu0 %v778
  %923 = vmatprep.subr.mxu0 %v781
  %924 = vmatpush1.msra.mxu0 %v780
  %925 = vmatprep.subr.mxu0 %v783
  %926 = vmatpush1.msra.mxu0 %v782
  %927 = vmatprep.subr.mxu0 %v785
  %928 = vmatpush1.msra.mxu0 %v784
  %929 = vmatprep.subr.mxu0 %v787
  %930 = vmatpush1.msra.mxu0 %v786
  %931 = vmatprep.subr.mxu0 %v789
  %932 = vmatpush1.msra.mxu0 %v788
  %933 = vmatprep.subr.mxu0 %v791
  %934 = vmatpush1.msra.mxu0 %v790
  %935 = vmatprep.subr.mxu0 %v793
  %936 = vmatpush1.msra.mxu0 %v792
  %937 = vmatprep.subr.mxu0 %v795
  %938 = vmatpush1.msra.mxu0 %v794
  %939 = vmatprep.subr.mxu0 %v797
  %940 = vmatpush1.msra.mxu0 %v796
  %941 = vmatprep.subr.mxu0 %v810
  %942 = vmatpush1.msra.mxu0 %v807
  %943 = vmatprep.subr.mxu0 0.0
  %944 = vmatpush1.msra.mxu0 0.0
  %945 = vmatprep.subr.mxu0 0.0
  %946 = vmatpush1.msra.mxu0 0.0
  %947 = vmatprep.subr.mxu0 0.0
  %948 = vmatpush1.msra.mxu0 0.0
  %949 = vmatprep.subr.mxu0 0.0
  %950 = vmatpush1.msra.mxu0 0.0
  %951 = vmatprep.subr.mxu0 0.0
  %952 = vmatpush1.msra.mxu0 0.0
  %953 = vmatprep.subr.mxu0 0.0
  %954 = vmatpush1.msra.mxu0 0.0
  %955 = vmatprep.subr.mxu0 0.0
  %956 = vmatpush1.msra.mxu0 0.0
  %957 = vmatprep.mubr.f32.mxu0 %v891
  %958 = vmatmul.mubr.f32.gmra.mrb[0].mxu0 %v679
  %v959 = vpop.f32.mrb[0].mxu0
  %v960 = vadd.f32 0.0, %v959
  %v961 = vpop.f32.mrb[0].mxu0
  %v962 = vadd.f32 0.0, %v961
  %963 = vdwg.mxu0
  %964 = vrot.lane.b32.xlu0 %v960, 1
  %v965 = vpop.permute.xlu0 %964
  %966 = vrot.lane.b32.xlu0 %v962, 1
  %v967 = vpop.permute.xlu0 %966
  %v968 = vlaneseq
  %v969 = vand.u32 %v968, 127
  %vm970 = vcmp.lt.s32.totalorder %v969, 1
  %v971 = vsel %vm970, %v965, %v967
  %v972 = vsel %vm970, %v967, %v965
  %v973 = vadd.f32 %v888, %v972
  %v974 = vadd.f32 %v889, %v971
  %v976 = vsel %vm801, %v687, 0
  %978 = vmatprep.subr.mxu0 %v751
  %979 = vmatpush1.msra.mxu0 %v750
  %980 = vmatprep.subr.mxu0 %v753
  %981 = vmatpush1.msra.mxu0 %v752
  %982 = vmatprep.subr.mxu0 %v755
  %983 = vmatpush1.msra.mxu0 %v754
  %984 = vmatprep.subr.mxu0 %v757
  %985 = vmatpush1.msra.mxu0 %v756
  %986 = vmatprep.subr.mxu0 %v759
  %987 = vmatpush1.msra.mxu0 %v758
  %988 = vmatprep.subr.mxu0 %v761
  %989 = vmatpush1.msra.mxu0 %v760
  %990 = vmatprep.subr.mxu0 %v763
  %991 = vmatpush1.msra.mxu0 %v762
  %992 = vmatprep.subr.mxu0 %v765
  %993 = vmatpush1.msra.mxu0 %v764
  %994 = vmatprep.subr.mxu0 %v767
  %995 = vmatpush1.msra.mxu0 %v766
  %996 = vmatprep.subr.mxu0 %v769
  %997 = vmatpush1.msra.mxu0 %v768
  %998 = vmatprep.subr.mxu0 %v771
  %999 = vmatpush1.msra.mxu0 %v770
  %1000 = vmatprep.subr.mxu0 %v773
  %1001 = vmatpush1.msra.mxu0 %v772
  %1002 = vmatprep.subr.mxu0 %v775
  %1003 = vmatpush1.msra.mxu0 %v774
  %1004 = vmatprep.subr.mxu0 %v777
  %1005 = vmatpush1.msra.mxu0 %v776
  %1006 = vmatprep.subr.mxu0 %v779
  %1007 = vmatpush1.msra.mxu0 %v778
  %1008 = vmatprep.subr.mxu0 %v781
  %1009 = vmatpush1.msra.mxu0 %v780
  %1010 = vmatprep.subr.mxu0 %v783
  %1011 = vmatpush1.msra.mxu0 %v782
  %1012 = vmatprep.subr.mxu0 %v785
  %1013 = vmatpush1.msra.mxu0 %v784
  %1014 = vmatprep.subr.mxu0 %v787
  %1015 = vmatpush1.msra.mxu0 %v786
  %1016 = vmatprep.subr.mxu0 %v789
  %1017 = vmatpush1.msra.mxu0 %v788
  %1018 = vmatprep.subr.mxu0 %v791
  %1019 = vmatpush1.msra.mxu0 %v790
  %1020 = vmatprep.subr.mxu0 %v793
  %1021 = vmatpush1.msra.mxu0 %v792
  %1022 = vmatprep.subr.mxu0 %v795
  %1023 = vmatpush1.msra.mxu0 %v794
  %1024 = vmatprep.subr.mxu0 %v797
  %1025 = vmatpush1.msra.mxu0 %v796
  %1026 = vmatprep.subr.mxu0 %v810
  %1027 = vmatpush1.msra.mxu0 %v807
  %1028 = vmatprep.subr.mxu0 0.0
  %1029 = vmatpush1.msra.mxu0 0.0
  %1030 = vmatprep.subr.mxu0 0.0
  %1031 = vmatpush1.msra.mxu0 0.0
  %1032 = vmatprep.subr.mxu0 0.0
  %1033 = vmatpush1.msra.mxu0 0.0
  %1034 = vmatprep.subr.mxu0 0.0
  %1035 = vmatpush1.msra.mxu0 0.0
  %1036 = vmatprep.subr.mxu0 0.0
  %1037 = vmatpush1.msra.mxu0 0.0
  %1038 = vmatprep.subr.mxu0 0.0
  %1039 = vmatpush1.msra.mxu0 0.0
  %1040 = vmatprep.subr.mxu0 0.0
  %1041 = vmatpush1.msra.mxu0 0.0
  %1042 = vmatprep.mubr.f32.mxu0 %v976
  %1043 = vmatmul.mubr.f32.gmra.mrb[0].mxu0 %v685
  %v1044 = vpop.f32.mrb[0].mxu0
  %v1045 = vadd.f32 0.0, %v1044
  %v1046 = vpop.f32.mrb[0].mxu0
  %v1047 = vadd.f32 0.0, %v1046
  %1048 = vdwg.mxu0
  %1049 = vrot.lane.b32.xlu0 %v1045, 2
  %v1050 = vpop.permute.xlu0 %1049
  %1051 = vrot.lane.b32.xlu0 %v1047, 2
  %v1052 = vpop.permute.xlu0 %1051
  %vm1053 = vcmp.lt.s32.totalorder %v969, 2
  %v1054 = vsel %vm1053, %v1050, %v1052
  %v1055 = vsel %vm1053, %v1052, %v1050
  %v1056 = vadd.f32 %v973, %v1055
  %v1057 = vadd.f32 %v974, %v1054
  %v1059 = vsel %vm801, %v693, 0
  %1061 = vmatprep.subr.mxu0 %v751
  %1062 = vmatpush1.msra.mxu0 %v750
  %1063 = vmatprep.subr.mxu0 %v753
  %1064 = vmatpush1.msra.mxu0 %v752
  %1065 = vmatprep.subr.mxu0 %v755
  %1066 = vmatpush1.msra.mxu0 %v754
  %1067 = vmatprep.subr.mxu0 %v757
  %1068 = vmatpush1.msra.mxu0 %v756
  %1069 = vmatprep.subr.mxu0 %v759
  %1070 = vmatpush1.msra.mxu0 %v758
  %1071 = vmatprep.subr.mxu0 %v761
  %1072 = vmatpush1.msra.mxu0 %v760
  %1073 = vmatprep.subr.mxu0 %v763
  %1074 = vmatpush1.msra.mxu0 %v762
  %1075 = vmatprep.subr.mxu0 %v765
  %1076 = vmatpush1.msra.mxu0 %v764
  %1077 = vmatprep.subr.mxu0 %v767
  %1078 = vmatpush1.msra.mxu0 %v766
  %1079 = vmatprep.subr.mxu0 %v769
  %1080 = vmatpush1.msra.mxu0 %v768
  %1081 = vmatprep.subr.mxu0 %v771
  %1082 = vmatpush1.msra.mxu0 %v770
  %1083 = vmatprep.subr.mxu0 %v773
  %1084 = vmatpush1.msra.mxu0 %v772
  %1085 = vmatprep.subr.mxu0 %v775
  %1086 = vmatpush1.msra.mxu0 %v774
  %1087 = vmatprep.subr.mxu0 %v777
  %1088 = vmatpush1.msra.mxu0 %v776
  %1089 = vmatprep.subr.mxu0 %v779
  %1090 = vmatpush1.msra.mxu0 %v778
  %1091 = vmatprep.subr.mxu0 %v781
  %1092 = vmatpush1.msra.mxu0 %v780
  %1093 = vmatprep.subr.mxu0 %v783
  %1094 = vmatpush1.msra.mxu0 %v782
  %1095 = vmatprep.subr.mxu0 %v785
  %1096 = vmatpush1.msra.mxu0 %v784
  %1097 = vmatprep.subr.mxu0 %v787
  %1098 = vmatpush1.msra.mxu0 %v786
  %1099 = vmatprep.subr.mxu0 %v789
  %1100 = vmatpush1.msra.mxu0 %v788
  %1101 = vmatprep.subr.mxu0 %v791
  %1102 = vmatpush1.msra.mxu0 %v790
  %1103 = vmatprep.subr.mxu0 %v793
  %1104 = vmatpush1.msra.mxu0 %v792
  %1105 = vmatprep.subr.mxu0 %v795
  %1106 = vmatpush1.msra.mxu0 %v794
  %1107 = vmatprep.subr.mxu0 %v797
  %1108 = vmatpush1.msra.mxu0 %v796
  %1109 = vmatprep.subr.mxu0 %v810
  %1110 = vmatpush1.msra.mxu0 %v807
  %1111 = vmatprep.subr.mxu0 0.0
  %1112 = vmatpush1.msra.mxu0 0.0
  %1113 = vmatprep.subr.mxu0 0.0
  %1114 = vmatpush1.msra.mxu0 0.0
  %1115 = vmatprep.subr.mxu0 0.0
  %1116 = vmatpush1.msra.mxu0 0.0
  %1117 = vmatprep.subr.mxu0 0.0
  %1118 = vmatpush1.msra.mxu0 0.0
  %1119 = vmatprep.subr.mxu0 0.0
  %1120 = vmatpush1.msra.mxu0 0.0
  %1121 = vmatprep.subr.mxu0 0.0
  %1122 = vmatpush1.msra.mxu0 0.0
  %1123 = vmatprep.subr.mxu0 0.0
  %1124 = vmatpush1.msra.mxu0 0.0
  %1125 = vmatprep.mubr.f32.mxu0 %v1059
  %1126 = vmatmul.mubr.f32.gmra.mrb[0].mxu0 %v691
  %v1127 = vpop.f32.mrb[0].mxu0
  %v1128 = vadd.f32 0.0, %v1127
  %v1129 = vpop.f32.mrb[0].mxu0
  %v1130 = vadd.f32 0.0, %v1129
  %1131 = vdwg.mxu0
  %1132 = vrot.lane.b32.xlu0 %v1128, 16
  %v1133 = vpop.permute.xlu0 %1132
  %1134 = vrot.lane.b32.xlu0 %v1130, 16
  %v1135 = vpop.permute.xlu0 %1134
  %vm1136 = vcmp.lt.s32.totalorder %v969, 16
  %v1137 = vsel %vm1136, %v1133, %v1135
  %v1138 = vsel %vm1136, %v1135, %v1133
  %v1139 = vadd.f32 %v1056, %v1138
  %v1140 = vadd.f32 %v1057, %v1137
  %v1142 = vsel %vm801, %v699, 0
  %1144 = vmatprep.subr.mxu0 %v751
  %1145 = vmatpush1.msra.mxu0 %v750
  %1146 = vmatprep.subr.mxu0 %v753
  %1147 = vmatpush1.msra.mxu0 %v752
  %1148 = vmatprep.subr.mxu0 %v755
  %1149 = vmatpush1.msra.mxu0 %v754
  %1150 = vmatprep.subr.mxu0 %v757
  %1151 = vmatpush1.msra.mxu0 %v756
  %1152 = vmatprep.subr.mxu0 %v759
  %1153 = vmatpush1.msra.mxu0 %v758
  %1154 = vmatprep.subr.mxu0 %v761
  %1155 = vmatpush1.msra.mxu0 %v760
  %1156 = vmatprep.subr.mxu0 %v763
  %1157 = vmatpush1.msra.mxu0 %v762
  %1158 = vmatprep.subr.mxu0 %v765
  %1159 = vmatpush1.msra.mxu0 %v764
  %1160 = vmatprep.subr.mxu0 %v767
  %1161 = vmatpush1.msra.mxu0 %v766
  %1162 = vmatprep.subr.mxu0 %v769
  %1163 = vmatpush1.msra.mxu0 %v768
  %1164 = vmatprep.subr.mxu0 %v771
  %1165 = vmatpush1.msra.mxu0 %v770
  %1166 = vmatprep.subr.mxu0 %v773
  %1167 = vmatpush1.msra.mxu0 %v772
  %1168 = vmatprep.subr.mxu0 %v775
  %1169 = vmatpush1.msra.mxu0 %v774
  %1170 = vmatprep.subr.mxu0 %v777
  %1171 = vmatpush1.msra.mxu0 %v776
  %1172 = vmatprep.subr.mxu0 %v779
  %1173 = vmatpush1.msra.mxu0 %v778
  %1174 = vmatprep.subr.mxu0 %v781
  %1175 = vmatpush1.msra.mxu0 %v780
  %1176 = vmatprep.subr.mxu0 %v783
  %1177 = vmatpush1.msra.mxu0 %v782
  %1178 = vmatprep.subr.mxu0 %v785
  %1179 = vmatpush1.msra.mxu0 %v784
  %1180 = vmatprep.subr.mxu0 %v787
  %1181 = vmatpush1.msra.mxu0 %v786
  %1182 = vmatprep.subr.mxu0 %v789
  %1183 = vmatpush1.msra.mxu0 %v788
  %1184 = vmatprep.subr.mxu0 %v791
  %1185 = vmatpush1.msra.mxu0 %v790
  %1186 = vmatprep.subr.mxu0 %v793
  %1187 = vmatpush1.msra.mxu0 %v792
  %1188 = vmatprep.subr.mxu0 %v795
  %1189 = vmatpush1.msra.mxu0 %v794
  %1190 = vmatprep.subr.mxu0 %v797
  %1191 = vmatpush1.msra.mxu0 %v796
  %1192 = vmatprep.subr.mxu0 %v810
  %1193 = vmatpush1.msra.mxu0 %v807
  %1194 = vmatprep.subr.mxu0 0.0
  %1195 = vmatpush1.msra.mxu0 0.0
  %1196 = vmatprep.subr.mxu0 0.0
  %1197 = vmatpush1.msra.mxu0 0.0
  %1198 = vmatprep.subr.mxu0 0.0
  %1199 = vmatpush1.msra.mxu0 0.0
  %1200 = vmatprep.subr.mxu0 0.0
  %1201 = vmatpush1.msra.mxu0 0.0
  %1202 = vmatprep.subr.mxu0 0.0
  %1203 = vmatpush1.msra.mxu0 0.0
  %1204 = vmatprep.subr.mxu0 0.0
  %1205 = vmatpush1.msra.mxu0 0.0
  %1206 = vmatprep.subr.mxu0 0.0
  %1207 = vmatpush1.msra.mxu0 0.0
  %1208 = vmatprep.mubr.f32.mxu0 %v1142
  %1209 = vmatmul.mubr.f32.gmra.mrb[0].mxu0 %v697
  %v1210 = vpop.f32.mrb[0].mxu0
  %v1211 = vadd.f32 0.0, %v1210
  %v1212 = vpop.f32.mrb[0].mxu0
  %v1213 = vadd.f32 0.0, %v1212
  %1214 = vdwg.mxu0
  %1215 = vrot.lane.b32.xlu0 %v1211, 17
  %v1216 = vpop.permute.xlu0 %1215
  %1217 = vrot.lane.b32.xlu0 %v1213, 17
  %v1218 = vpop.permute.xlu0 %1217
  %vm1219 = vcmp.lt.s32.totalorder %v969, 17
  %v1220 = vsel %vm1219, %v1216, %v1218
  %v1221 = vsel %vm1219, %v1218, %v1216
  %v1222 = vadd.f32 %v1139, %v1221
  %v1223 = vadd.f32 %v1140, %v1220
  %v1225 = vsel %vm801, %v705, 0
  %1227 = vmatprep.subr.mxu0 %v751
  %1228 = vmatpush1.msra.mxu0 %v750
  %1229 = vmatprep.subr.mxu0 %v753
  %1230 = vmatpush1.msra.mxu0 %v752
  %1231 = vmatprep.subr.mxu0 %v755
  %1232 = vmatpush1.msra.mxu0 %v754
  %1233 = vmatprep.subr.mxu0 %v757
  %1234 = vmatpush1.msra.mxu0 %v756
  %1235 = vmatprep.subr.mxu0 %v759
  %1236 = vmatpush1.msra.mxu0 %v758
  %1237 = vmatprep.subr.mxu0 %v761
  %1238 = vmatpush1.msra.mxu0 %v760
  %1239 = vmatprep.subr.mxu0 %v763
  %1240 = vmatpush1.msra.mxu0 %v762
  %1241 = vmatprep.subr.mxu0 %v765
  %1242 = vmatpush1.msra.mxu0 %v764
  %1243 = vmatprep.subr.mxu0 %v767
  %1244 = vmatpush1.msra.mxu0 %v766
  %1245 = vmatprep.subr.mxu0 %v769
  %1246 = vmatpush1.msra.mxu0 %v768
  %1247 = vmatprep.subr.mxu0 %v771
  %1248 = vmatpush1.msra.mxu0 %v770
  %1249 = vmatprep.subr.mxu0 %v773
  %1250 = vmatpush1.msra.mxu0 %v772
  %1251 = vmatprep.subr.mxu0 %v775
  %1252 = vmatpush1.msra.mxu0 %v774
  %1253 = vmatprep.subr.mxu0 %v777
  %1254 = vmatpush1.msra.mxu0 %v776
  %1255 = vmatprep.subr.mxu0 %v779
  %1256 = vmatpush1.msra.mxu0 %v778
  %1257 = vmatprep.subr.mxu0 %v781
  %1258 = vmatpush1.msra.mxu0 %v780
  %1259 = vmatprep.subr.mxu0 %v783
  %1260 = vmatpush1.msra.mxu0 %v782
  %1261 = vmatprep.subr.mxu0 %v785
  %1262 = vmatpush1.msra.mxu0 %v784
  %1263 = vmatprep.subr.mxu0 %v787
  %1264 = vmatpush1.msra.mxu0 %v786
  %1265 = vmatprep.subr.mxu0 %v789
  %1266 = vmatpush1.msra.mxu0 %v788
  %1267 = vmatprep.subr.mxu0 %v791
  %1268 = vmatpush1.msra.mxu0 %v790
  %1269 = vmatprep.subr.mxu0 %v793
  %1270 = vmatpush1.msra.mxu0 %v792
  %1271 = vmatprep.subr.mxu0 %v795
  %1272 = vmatpush1.msra.mxu0 %v794
  %1273 = vmatprep.subr.mxu0 %v797
  %1274 = vmatpush1.msra.mxu0 %v796
  %1275 = vmatprep.subr.mxu0 %v810
  %1276 = vmatpush1.msra.mxu0 %v807
  %1277 = vmatprep.subr.mxu0 0.0
  %1278 = vmatpush1.msra.mxu0 0.0
  %1279 = vmatprep.subr.mxu0 0.0
  %1280 = vmatpush1.msra.mxu0 0.0
  %1281 = vmatprep.subr.mxu0 0.0
  %1282 = vmatpush1.msra.mxu0 0.0
  %1283 = vmatprep.subr.mxu0 0.0
  %1284 = vmatpush1.msra.mxu0 0.0
  %1285 = vmatprep.subr.mxu0 0.0
  %1286 = vmatpush1.msra.mxu0 0.0
  %1287 = vmatprep.subr.mxu0 0.0
  %1288 = vmatpush1.msra.mxu0 0.0
  %1289 = vmatprep.subr.mxu0 0.0
  %1290 = vmatpush1.msra.mxu0 0.0
  %1291 = vmatprep.mubr.f32.mxu0 %v1225
  %1292 = vmatmul.mubr.f32.gmra.mrb[0].mxu0 %v703
  %v1293 = vpop.f32.mrb[0].mxu0
  %v1294 = vadd.f32 0.0, %v1293
  %v1295 = vpop.f32.mrb[0].mxu0
  %v1296 = vadd.f32 0.0, %v1295
  %1297 = vdwg.mxu0
  %1298 = vrot.lane.b32.xlu0 %v1294, 18
  %v1299 = vpop.permute.xlu0 %1298
  %1300 = vrot.lane.b32.xlu0 %v1296, 18
  %v1301 = vpop.permute.xlu0 %1300
  %vm1302 = vcmp.lt.s32.totalorder %v969, 18
  %v1303 = vsel %vm1302, %v1299, %v1301
  %v1304 = vsel %vm1302, %v1301, %v1299
  %v1305 = vadd.f32 %v1222, %v1304
  %v1306 = vadd.f32 %v1223, %v1303
  %v1308 = vsel %vm801, %v711, 0
  %1310 = vmatprep.subr.mxu0 %v751
  %1311 = vmatpush1.msra.mxu0 %v750
  %1312 = vmatprep.subr.mxu0 %v753
  %1313 = vmatpush1.msra.mxu0 %v752
  %1314 = vmatprep.subr.mxu0 %v755
  %1315 = vmatpush1.msra.mxu0 %v754
  %1316 = vmatprep.subr.mxu0 %v757
  %1317 = vmatpush1.msra.mxu0 %v756
  %1318 = vmatprep.subr.mxu0 %v759
  %1319 = vmatpush1.msra.mxu0 %v758
  %1320 = vmatprep.subr.mxu0 %v761
  %1321 = vmatpush1.msra.mxu0 %v760
  %1322 = vmatprep.subr.mxu0 %v763
  %1323 = vmatpush1.msra.mxu0 %v762
  %1324 = vmatprep.subr.mxu0 %v765
  %1325 = vmatpush1.msra.mxu0 %v764
  %1326 = vmatprep.subr.mxu0 %v767
  %1327 = vmatpush1.msra.mxu0 %v766
  %1328 = vmatprep.subr.mxu0 %v769
  %1329 = vmatpush1.msra.mxu0 %v768
  %1330 = vmatprep.subr.mxu0 %v771
  %1331 = vmatpush1.msra.mxu0 %v770
  %1332 = vmatprep.subr.mxu0 %v773
  %1333 = vmatpush1.msra.mxu0 %v772
  %1334 = vmatprep.subr.mxu0 %v775
  %1335 = vmatpush1.msra.mxu0 %v774
  %1336 = vmatprep.subr.mxu0 %v777
  %1337 = vmatpush1.msra.mxu0 %v776
  %1338 = vmatprep.subr.mxu0 %v779
  %1339 = vmatpush1.msra.mxu0 %v778
  %1340 = vmatprep.subr.mxu0 %v781
  %1341 = vmatpush1.msra.mxu0 %v780
  %1342 = vmatprep.subr.mxu0 %v783
  %1343 = vmatpush1.msra.mxu0 %v782
  %1344 = vmatprep.subr.mxu0 %v785
  %1345 = vmatpush1.msra.mxu0 %v784
  %1346 = vmatprep.subr.mxu0 %v787
  %1347 = vmatpush1.msra.mxu0 %v786
  %1348 = vmatprep.subr.mxu0 %v789
  %1349 = vmatpush1.msra.mxu0 %v788
  %1350 = vmatprep.subr.mxu0 %v791
  %1351 = vmatpush1.msra.mxu0 %v790
  %1352 = vmatprep.subr.mxu0 %v793
  %1353 = vmatpush1.msra.mxu0 %v792
  %1354 = vmatprep.subr.mxu0 %v795
  %1355 = vmatpush1.msra.mxu0 %v794
  %1356 = vmatprep.subr.mxu0 %v797
  %1357 = vmatpush1.msra.mxu0 %v796
  %1358 = vmatprep.subr.mxu0 %v810
  %1359 = vmatpush1.msra.mxu0 %v807
  %1360 = vmatprep.subr.mxu0 0.0
  %1361 = vmatpush1.msra.mxu0 0.0
  %1362 = vmatprep.subr.mxu0 0.0
  %1363 = vmatpush1.msra.mxu0 0.0
  %1364 = vmatprep.subr.mxu0 0.0
  %1365 = vmatpush1.msra.mxu0 0.0
  %1366 = vmatprep.subr.mxu0 0.0
  %1367 = vmatpush1.msra.mxu0 0.0
  %1368 = vmatprep.subr.mxu0 0.0
  %1369 = vmatpush1.msra.mxu0 0.0
  %1370 = vmatprep.subr.mxu0 0.0
  %1371 = vmatpush1.msra.mxu0 0.0
  %1372 = vmatprep.subr.mxu0 0.0
  %1373 = vmatpush1.msra.mxu0 0.0
  %1374 = vmatprep.mubr.f32.mxu0 %v1308
  %1375 = vmatmul.mubr.f32.gmra.mrb[0].mxu0 %v709
  %v1376 = vpop.f32.mrb[0].mxu0
  %v1377 = vadd.f32 0.0, %v1376
  %v1378 = vpop.f32.mrb[0].mxu0
  %v1379 = vadd.f32 0.0, %v1378
  %1380 = vdwg.mxu0
  %1381 = vrot.lane.b32.xlu0 %v1377, 32
  %v1382 = vpop.permute.xlu0 %1381
  %1383 = vrot.lane.b32.xlu0 %v1379, 32
  %v1384 = vpop.permute.xlu0 %1383
  %vm1385 = vcmp.lt.s32.totalorder %v969, 32
  %v1386 = vsel %vm1385, %v1382, %v1384
  %v1387 = vsel %vm1385, %v1384, %v1382
  %v1388 = vadd.f32 %v1305, %v1387
  %v1389 = vadd.f32 %v1306, %v1386
  %v1391 = vsel %vm801, %v717, 0
  %1393 = vmatprep.subr.mxu0 %v751
  %1394 = vmatpush1.msra.mxu0 %v750
  %1395 = vmatprep.subr.mxu0 %v753
  %1396 = vmatpush1.msra.mxu0 %v752
  %1397 = vmatprep.subr.mxu0 %v755
  %1398 = vmatpush1.msra.mxu0 %v754
  %1399 = vmatprep.subr.mxu0 %v757
  %1400 = vmatpush1.msra.mxu0 %v756
  %1401 = vmatprep.subr.mxu0 %v759
  %1402 = vmatpush1.msra.mxu0 %v758
  %1403 = vmatprep.subr.mxu0 %v761
  %1404 = vmatpush1.msra.mxu0 %v760
  %1405 = vmatprep.subr.mxu0 %v763
  %1406 = vmatpush1.msra.mxu0 %v762
  %1407 = vmatprep.subr.mxu0 %v765
  %1408 = vmatpush1.msra.mxu0 %v764
  %1409 = vmatprep.subr.mxu0 %v767
  %1410 = vmatpush1.msra.mxu0 %v766
  %1411 = vmatprep.subr.mxu0 %v769
  %1412 = vmatpush1.msra.mxu0 %v768
  %1413 = vmatprep.subr.mxu0 %v771
  %1414 = vmatpush1.msra.mxu0 %v770
  %1415 = vmatprep.subr.mxu0 %v773
  %1416 = vmatpush1.msra.mxu0 %v772
  %1417 = vmatprep.subr.mxu0 %v775
  %1418 = vmatpush1.msra.mxu0 %v774
  %1419 = vmatprep.subr.mxu0 %v777
  %1420 = vmatpush1.msra.mxu0 %v776
  %1421 = vmatprep.subr.mxu0 %v779
  %1422 = vmatpush1.msra.mxu0 %v778
  %1423 = vmatprep.subr.mxu0 %v781
  %1424 = vmatpush1.msra.mxu0 %v780
  %1425 = vmatprep.subr.mxu0 %v783
  %1426 = vmatpush1.msra.mxu0 %v782
  %1427 = vmatprep.subr.mxu0 %v785
  %1428 = vmatpush1.msra.mxu0 %v784
  %1429 = vmatprep.subr.mxu0 %v787
  %1430 = vmatpush1.msra.mxu0 %v786
  %1431 = vmatprep.subr.mxu0 %v789
  %1432 = vmatpush1.msra.mxu0 %v788
  %1433 = vmatprep.subr.mxu0 %v791
  %1434 = vmatpush1.msra.mxu0 %v790
  %1435 = vmatprep.subr.mxu0 %v793
  %1436 = vmatpush1.msra.mxu0 %v792
  %1437 = vmatprep.subr.mxu0 %v795
  %1438 = vmatpush1.msra.mxu0 %v794
  %1439 = vmatprep.subr.mxu0 %v797
  %1440 = vmatpush1.msra.mxu0 %v796
  %1441 = vmatprep.subr.mxu0 %v810
  %1442 = vmatpush1.msra.mxu0 %v807
  %1443 = vmatprep.subr.mxu0 0.0
  %1444 = vmatpush1.msra.mxu0 0.0
  %1445 = vmatprep.subr.mxu0 0.0
  %1446 = vmatpush1.msra.mxu0 0.0
  %1447 = vmatprep.subr.mxu0 0.0
  %1448 = vmatpush1.msra.mxu0 0.0
  %1449 = vmatprep.subr.mxu0 0.0
  %1450 = vmatpush1.msra.mxu0 0.0
  %1451 = vmatprep.subr.mxu0 0.0
  %1452 = vmatpush1.msra.mxu0 0.0
  %1453 = vmatprep.subr.mxu0 0.0
  %1454 = vmatpush1.msra.mxu0 0.0
  %1455 = vmatprep.subr.mxu0 0.0
  %1456 = vmatpush1.msra.mxu0 0.0
  %1457 = vmatprep.mubr.f32.mxu0 %v1391
  %1458 = vmatmul.mubr.f32.gmra.mrb[0].mxu0 %v715
  %v1459 = vpop.f32.mrb[0].mxu0
  %v1460 = vadd.f32 0.0, %v1459
  %v1461 = vpop.f32.mrb[0].mxu0
  %v1462 = vadd.f32 0.0, %v1461
  %1463 = vdwg.mxu0
  %1464 = vrot.lane.b32.xlu0 %v1460, 33
  %v1465 = vpop.permute.xlu0 %1464
  %1466 = vrot.lane.b32.xlu0 %v1462, 33
  %v1467 = vpop.permute.xlu0 %1466
  %vm1468 = vcmp.lt.s32.totalorder %v969, 33
  %v1469 = vsel %vm1468, %v1465, %v1467
  %v1470 = vsel %vm1468, %v1467, %v1465
  %v1471 = vadd.f32 %v1388, %v1470
  %v1472 = vadd.f32 %v1389, %v1469
  %v1474 = vsel %vm801, %v723, 0
  %1476 = vmatprep.subr.mxu0 %v751
  %1477 = vmatpush1.msra.mxu0 %v750
  %1478 = vmatprep.subr.mxu0 %v753
  %1479 = vmatpush1.msra.mxu0 %v752
  %1480 = vmatprep.subr.mxu0 %v755
  %1481 = vmatpush1.msra.mxu0 %v754
  %1482 = vmatprep.subr.mxu0 %v757
  %1483 = vmatpush1.msra.mxu0 %v756
  %1484 = vmatprep.subr.mxu0 %v759
  %1485 = vmatpush1.msra.mxu0 %v758
  %1486 = vmatprep.subr.mxu0 %v761
  %1487 = vmatpush1.msra.mxu0 %v760
  %1488 = vmatprep.subr.mxu0 %v763
  %1489 = vmatpush1.msra.mxu0 %v762
  %1490 = vmatprep.subr.mxu0 %v765
  %1491 = vmatpush1.msra.mxu0 %v764
  %1492 = vmatprep.subr.mxu0 %v767
  %1493 = vmatpush1.msra.mxu0 %v766
  %1494 = vmatprep.subr.mxu0 %v769
  %1495 = vmatpush1.msra.mxu0 %v768
  %1496 = vmatprep.subr.mxu0 %v771
  %1497 = vmatpush1.msra.mxu0 %v770
  %1498 = vmatprep.subr.mxu0 %v773
  %1499 = vmatpush1.msra.mxu0 %v772
  %1500 = vmatprep.subr.mxu0 %v775
  %1501 = vmatpush1.msra.mxu0 %v774
  %1502 = vmatprep.subr.mxu0 %v777
  %1503 = vmatpush1.msra.mxu0 %v776
  %1504 = vmatprep.subr.mxu0 %v779
  %1505 = vmatpush1.msra.mxu0 %v778
  %1506 = vmatprep.subr.mxu0 %v781
  %1507 = vmatpush1.msra.mxu0 %v780
  %1508 = vmatprep.subr.mxu0 %v783
  %1509 = vmatpush1.msra.mxu0 %v782
  %1510 = vmatprep.subr.mxu0 %v785
  %1511 = vmatpush1.msra.mxu0 %v784
  %1512 = vmatprep.subr.mxu0 %v787
  %1513 = vmatpush1.msra.mxu0 %v786
  %1514 = vmatprep.subr.mxu0 %v789
  %1515 = vmatpush1.msra.mxu0 %v788
  %1516 = vmatprep.subr.mxu0 %v791
  %1517 = vmatpush1.msra.mxu0 %v790
  %1518 = vmatprep.subr.mxu0 %v793
  %1519 = vmatpush1.msra.mxu0 %v792
  %1520 = vmatprep.subr.mxu0 %v795
  %1521 = vmatpush1.msra.mxu0 %v794
  %1522 = vmatprep.subr.mxu0 %v797
  %1523 = vmatpush1.msra.mxu0 %v796
  %1524 = vmatprep.subr.mxu0 %v810
  %1525 = vmatpush1.msra.mxu0 %v807
  %1526 = vmatprep.subr.mxu0 0.0
  %1527 = vmatpush1.msra.mxu0 0.0
  %1528 = vmatprep.subr.mxu0 0.0
  %1529 = vmatpush1.msra.mxu0 0.0
  %1530 = vmatprep.subr.mxu0 0.0
  %1531 = vmatpush1.msra.mxu0 0.0
  %1532 = vmatprep.subr.mxu0 0.0
  %1533 = vmatpush1.msra.mxu0 0.0
  %1534 = vmatprep.subr.mxu0 0.0
  %1535 = vmatpush1.msra.mxu0 0.0
  %1536 = vmatprep.subr.mxu0 0.0
  %1537 = vmatpush1.msra.mxu0 0.0
  %1538 = vmatprep.subr.mxu0 0.0
  %1539 = vmatpush1.msra.mxu0 0.0
  %1540 = vmatprep.mubr.f32.mxu0 %v1474
  %1541 = vmatmul.mubr.f32.gmra.mrb[0].mxu0 %v721
  %v1542 = vpop.f32.mrb[0].mxu0
  %v1543 = vadd.f32 0.0, %v1542
  %v1544 = vpop.f32.mrb[0].mxu0
  %v1545 = vadd.f32 0.0, %v1544
  %1546 = vdwg.mxu0
  %1547 = vrot.lane.b32.xlu0 %v1543, 34
  %v1548 = vpop.permute.xlu0 %1547
  %1549 = vrot.lane.b32.xlu0 %v1545, 34
  %v1550 = vpop.permute.xlu0 %1549
  %vm1551 = vcmp.lt.s32.totalorder %v969, 34
  %v1552 = vsel %vm1551, %v1548, %v1550
  %v1553 = vsel %vm1551, %v1550, %v1548
  %v1554 = vadd.f32 %v1471, %v1553
  %v1555 = vadd.f32 %v1472, %v1552
  %v1556 = vld [vmem:[%s9] sm:$0xff]
  %v1557 = vld [vmem:[%s10] sm:$0xff]
  %1559 = vset.pattern.permute.xlu0 0
  %1560 = vperm.xlu0 %1559, %v1557
  %v1561 = vpop.permute.xlu0 %1560
  %v1564 = vsel %vm51, %v1556, 0
  %1566 = vmatprep.subr.mxu0 %v1555
  %1567 = vmatpush1.msra.mxu0 %v1554
  %1568 = vmatprep.subr.mxu0 0.0
  %1569 = vmatpush1.msra.mxu0 0.0
  %1570 = vmatprep.subr.mxu0 0.0
  %1571 = vmatpush1.msra.mxu0 0.0
  %1572 = vmatprep.subr.mxu0 0.0
  %1573 = vmatpush1.msra.mxu0 0.0
  %1574 = vmatprep.subr.mxu0 0.0
  %1575 = vmatpush1.msra.mxu0 0.0
  %1576 = vmatprep.subr.mxu0 0.0
  %1577 = vmatpush1.msra.mxu0 0.0
  %1578 = vmatprep.subr.mxu0 0.0
  %1579 = vmatpush1.msra.mxu0 0.0
  %1580 = vmatprep.subr.mxu0 0.0
  %1581 = vmatpush1.msra.mxu0 0.0
  %1582 = vmatprep.subr.mxu0 0.0
  %1583 = vmatpush1.msra.mxu0 0.0
  %1584 = vmatprep.subr.mxu0 0.0
  %1585 = vmatpush1.msra.mxu0 0.0
  %1586 = vmatprep.subr.mxu0 0.0
  %1587 = vmatpush1.msra.mxu0 0.0
  %1588 = vmatprep.subr.mxu0 0.0
  %1589 = vmatpush1.msra.mxu0 0.0
  %1590 = vmatprep.subr.mxu0 0.0
  %1591 = vmatpush1.msra.mxu0 0.0
  %1592 = vmatprep.subr.mxu0 0.0
  %1593 = vmatpush1.msra.mxu0 0.0
  %1594 = vmatprep.subr.mxu0 0.0
  %1595 = vmatpush1.msra.mxu0 0.0
  %1596 = vmatprep.subr.mxu0 0.0
  %1597 = vmatpush1.msra.mxu0 0.0
  %1598 = vmatprep.subr.mxu0 0.0
  %1599 = vmatpush1.msra.mxu0 0.0
  %1600 = vmatprep.subr.mxu0 0.0
  %1601 = vmatpush1.msra.mxu0 0.0
  %1602 = vmatprep.subr.mxu0 0.0
  %1603 = vmatpush1.msra.mxu0 0.0
  %1604 = vmatprep.subr.mxu0 0.0
  %1605 = vmatpush1.msra.mxu0 0.0
  %1606 = vmatprep.subr.mxu0 0.0
  %1607 = vmatpush1.msra.mxu0 0.0
  %1608 = vmatprep.subr.mxu0 0.0
  %1609 = vmatpush1.msra.mxu0 0.0
  %1610 = vmatprep.subr.mxu0 0.0
  %1611 = vmatpush1.msra.mxu0 0.0
  %1612 = vmatprep.subr.mxu0 0.0
  %1613 = vmatpush1.msra.mxu0 0.0
  %1614 = vmatprep.subr.mxu0 0.0
  %1615 = vmatpush1.msra.mxu0 0.0
  %1616 = vmatprep.subr.mxu0 0.0
  %1617 = vmatpush1.msra.mxu0 0.0
  %1618 = vmatprep.subr.mxu0 0.0
  %1619 = vmatpush1.msra.mxu0 0.0
  %1620 = vmatprep.subr.mxu0 0.0
  %1621 = vmatpush1.msra.mxu0 0.0
  %1622 = vmatprep.subr.mxu0 0.0
  %1623 = vmatpush1.msra.mxu0 0.0
  %1624 = vmatprep.subr.mxu0 0.0
  %1625 = vmatpush1.msra.mxu0 0.0
  %1626 = vmatprep.subr.mxu0 0.0
  %1627 = vmatpush1.msra.mxu0 0.0
  %1628 = vmatprep.subr.mxu0 0.0
  %1629 = vmatpush1.msra.mxu0 0.0
  %1630 = vmatprep.mubr.f32.mxu0 0.0
  %1631 = vmatmul.mubr.f32.gmra.mrb[0].mxu0 %v1564
  %v1632 = vpop.f32.mrb[0].mxu0
  %v1633 = vadd.f32 %v1561, %v1632
  %v1634 = vpop.f32.mrb[0].mxu0
  %v1635 = vadd.f32 %v1561, %v1634
  %1636 = vdwg.mxu0
  %v1637 = vxor.u32 %v1633, 2147483648
  %v1638 = vxor.u32 %v1635, 2147483648
  %v1639 = vmul.f32 %v1637, 1.442695
  %v1640 = vpow.pop %v1639
  %v1641 = vmul.f32 %v1638, 1.442695
  %v1642 = vpow.pop %v1641
  %v1643 = vadd.f32 %v1640, 1.0
  %v1644 = vadd.f32 %v1642, 1.0
  %v1645 = vrcp.pop %v1643
  %v1646 = vmul.f32 1.0, %v1645
  %v1647 = vrcp.pop %v1644
  %v1648 = vmul.f32 1.0, %v1647
  %v1649 = vmul.f32 %v1633, %v1646
  %v1650 = vmul.f32 %v1635, %v1648
  %v1651 = vld [vmem:[%s1] sm:$0xff]
  %v1652 = vld [vmem:[%s2] sm:$0xff]
  %v1653 = vld [vmem:[%s2 + $0x8] sm:$0xff]
  %v1654 = vld [vmem:[%s2 + $0x10] sm:$0x3]
  %v1655 = vld [vmem:[%s2 + $0x18] sm:$0x3]
  %v1657 = vcombine.high %v1651, %v1651
  %v1663 = vrot.slane %v1652, 4
  %v1664 = vrot.slane %v1653, 4
  %v1665 = vrot.slane %v1654, 4
  %v1666 = vsel %vm805, %v1663, %v1665
  %v1667 = vrot.slane %v1655, 4
  %v1668 = vsel %vm805, %v1664, %v1667
  %v1673 = vsel %vm805, %v1651, %v1663
  %v1674 = vsel %vm805, %v1657, %v1664
  %v1675 = vand.u32 2147483647, %v1649
  %v1676 = vand.u32 2147483647, %v1650
  %v1677 = vand.u32 2147483647, %v1673
  %v1678 = vand.u32 2147483647, %v1674
  %v1679 = vand.u32 2147483647, %v1666
  %v1680 = vand.u32 2147483647, %v1668
  %v1681 = vxor.u32 %v1675, 2147483648
  %v1682 = vxor.u32 %v1676, 2147483648
  %v1683 = vxor.u32 %v1677, 2147483648
  %v1684 = vxor.u32 %v1678, 2147483648
  %v1685 = vxor.u32 %v1679, 2147483648
  %v1686 = vxor.u32 %v1680, 2147483648
  %v1687 = vmul.f32 %v1681, 1.442695
  %v1688 = vpow.pop %v1687
  %v1689 = vmul.f32 %v1682, 1.442695
  %v1690 = vpow.pop %v1689
  %v1691 = vmul.f32 %v1683, 1.442695
  %v1692 = vpow.pop %v1691
  %v1693 = vmul.f32 %v1684, 1.442695
  %v1694 = vpow.pop %v1693
  %v1695 = vmul.f32 %v1685, 1.442695
  %v1696 = vpow.pop %v1695
  %v1697 = vmul.f32 %v1686, 1.442695
  %v1698 = vpow.pop %v1697
  %v1699 = vadd.f32 %v1688, 1.0
  %v1700 = vadd.f32 %v1690, 1.0
  %v1701 = vadd.f32 %v1692, 1.0
  %v1702 = vadd.f32 %v1694, 1.0
  %v1703 = vadd.f32 %v1696, 1.0
  %v1704 = vadd.f32 %v1698, 1.0
  %v1705 = vrcp.pop %v1699
  %v1706 = vmul.f32 1.0, %v1705
  %v1707 = vrcp.pop %v1700
  %v1708 = vmul.f32 1.0, %v1707
  %v1709 = vrcp.pop %v1701
  %v1710 = vmul.f32 1.0, %v1709
  %v1711 = vrcp.pop %v1702
  %v1712 = vmul.f32 1.0, %v1711
  %v1713 = vrcp.pop %v1703
  %v1714 = vmul.f32 1.0, %v1713
  %v1715 = vrcp.pop %v1704
  %v1716 = vmul.f32 1.0, %v1715
  %v1717 = vld [vmem:[%s11] sm:$0xff]
  %v1718 = vld [vmem:[%s11 + $0x8] sm:$0xff]
  %v1719 = vld [vmem:[%s11 + $0x10] sm:$0xff]
  %v1720 = vld [vmem:[%s11 + $0x18] sm:$0xff]
  %v1721 = vld [vmem:[%s11 + $0x20] sm:$0xff]
  %v1722 = vld [vmem:[%s11 + $0x28] sm:$0xff]
  %v1723 = vld [vmem:[%s11 + $0x30] sm:$0xff]
  %v1724 = vld [vmem:[%s11 + $0x38] sm:$0xff]
  %v1725 = vld [vmem:[%s11 + $0x40] sm:$0xff]
  %v1726 = vld [vmem:[%s11 + $0x48] sm:$0xff]
  %v1727 = vld [vmem:[%s11 + $0x50] sm:$0xff]
  %v1728 = vld [vmem:[%s11 + $0x58] sm:$0xff]
  %v1729 = vld [vmem:[%s11 + $0x60] sm:$0xff]
  %v1730 = vld [vmem:[%s11 + $0x68] sm:$0xff]
  %v1731 = vld [vmem:[%s11 + $0x70] sm:$0xff]
  %v1732 = vld [vmem:[%s11 + $0x78] sm:$0xff]
  %v1733 = vld [vmem:[%s11 + $0x80] sm:$0xff]
  %v1734 = vld [vmem:[%s11 + $0x88] sm:$0xff]
  %v1735 = vld [vmem:[%s11 + $0x90] sm:$0xff]
  %v1736 = vld [vmem:[%s11 + $0x98] sm:$0xff]
  %v1737 = vld [vmem:[%s11 + $0xa0] sm:$0xff]
  %v1738 = vld [vmem:[%s11 + $0xa8] sm:$0xff]
  %v1739 = vld [vmem:[%s11 + $0xb0] sm:$0xff]
  %v1740 = vld [vmem:[%s11 + $0xb8] sm:$0xff]
  %v1741 = vld [vmem:[%s11 + $0xc0] sm:$0xff]
  %v1742 = vld [vmem:[%s11 + $0xc8] sm:$0xff]
  %v1743 = vld [vmem:[%s11 + $0xd0] sm:$0xff]
  %v1744 = vld [vmem:[%s11 + $0xd8] sm:$0xff]
  %v1745 = vld [vmem:[%s11 + $0xe0] sm:$0xff]
  %v1746 = vld [vmem:[%s11 + $0xe8] sm:$0xff]
  %v1747 = vld [vmem:[%s11 + $0xf0] sm:$0xff]
  %v1748 = vld [vmem:[%s11 + $0xf8] sm:$0xff]
  %v1749 = vld [vmem:[#allocation2] sm:$0x1]
  %v1751 = vlaneseq
  %v1752 = vshrl.u32 %v1751, 7
  %v1753 = vsub.s32 0, %v1752
  %v1754 = vrot.slane %v1749, %v1753
  %1755 = vset.pattern.permute.xlu0 0
  %1756 = vperm.xlu0 %1755, %v1754
  %v1757 = vpop.permute.xlu0 %1756
  %1759 = vmatprep.subr.mxu0 0.0
  %1760 = vmatpush1.msra.mxu0 %v1717
  %1761 = vmatprep.subr.mxu0 0.0
  %1762 = vmatpush1.msra.mxu0 %v1718
  %1763 = vmatprep.subr.mxu0 0.0
  %1764 = vmatpush1.msra.mxu0 %v1719
  %1765 = vmatprep.subr.mxu0 0.0
  %1766 = vmatpush1.msra.mxu0 %v1720
  %1767 = vmatprep.subr.mxu0 0.0
  %1768 = vmatpush1.msra.mxu0 %v1721
  %1769 = vmatprep.subr.mxu0 0.0
  %1770 = vmatpush1.msra.mxu0 %v1722
  %1771 = vmatprep.subr.mxu0 0.0
  %1772 = vmatpush1.msra.mxu0 %v1723
  %1773 = vmatprep.subr.mxu0 0.0
  %1774 = vmatpush1.msra.mxu0 %v1724
  %1775 = vmatprep.subr.mxu0 0.0
  %1776 = vmatpush1.msra.mxu0 %v1725
  %1777 = vmatprep.subr.mxu0 0.0
  %1778 = vmatpush1.msra.mxu0 %v1726
  %1779 = vmatprep.subr.mxu0 0.0
  %1780 = vmatpush1.msra.mxu0 %v1727
  %1781 = vmatprep.subr.mxu0 0.0
  %1782 = vmatpush1.msra.mxu0 %v1728
  %1783 = vmatprep.subr.mxu0 0.0
  %1784 = vmatpush1.msra.mxu0 %v1729
  %1785 = vmatprep.subr.mxu0 0.0
  %1786 = vmatpush1.msra.mxu0 %v1730
  %1787 = vmatprep.subr.mxu0 0.0
  %1788 = vmatpush1.msra.mxu0 %v1731
  %1789 = vmatprep.subr.mxu0 0.0
  %1790 = vmatpush1.msra.mxu0 %v1732
  %1791 = vmatprep.subr.mxu0 0.0
  %1792 = vmatpush1.msra.mxu0 %v1733
  %1793 = vmatprep.subr.mxu0 0.0
  %1794 = vmatpush1.msra.mxu0 %v1734
  %1795 = vmatprep.subr.mxu0 0.0
  %1796 = vmatpush1.msra.mxu0 %v1735
  %1797 = vmatprep.subr.mxu0 0.0
  %1798 = vmatpush1.msra.mxu0 %v1736
  %1799 = vmatprep.subr.mxu0 0.0
  %1800 = vmatpush1.msra.mxu0 %v1737
  %1801 = vmatprep.subr.mxu0 0.0
  %1802 = vmatpush1.msra.mxu0 %v1738
  %1803 = vmatprep.subr.mxu0 0.0
  %1804 = vmatpush1.msra.mxu0 %v1739
  %1805 = vmatprep.subr.mxu0 0.0
  %1806 = vmatpush1.msra.mxu0 %v1740
  %1807 = vmatprep.subr.mxu0 0.0
  %1808 = vmatpush1.msra.mxu0 %v1741
  %1809 = vmatprep.subr.mxu0 0.0
  %1810 = vmatpush1.msra.mxu0 %v1742
  %1811 = vmatprep.subr.mxu0 0.0
  %1812 = vmatpush1.msra.mxu0 %v1743
  %1813 = vmatprep.subr.mxu0 0.0
  %1814 = vmatpush1.msra.mxu0 %v1744
  %1815 = vmatprep.subr.mxu0 0.0
  %1816 = vmatpush1.msra.mxu0 %v1745
  %1817 = vmatprep.subr.mxu0 0.0
  %1818 = vmatpush1.msra.mxu0 %v1746
  %1819 = vmatprep.subr.mxu0 0.0
  %1820 = vmatpush1.msra.mxu0 %v1747
  %1821 = vmatprep.subr.mxu0 0.0
  %1822 = vmatpush1.msra.mxu0 %v1748
  %1823 = vmatprep.mubr.f32.mxu0 %v1708
  %1824 = vmatmul.mubr.f32.gmra.mrb[0].mxu0 %v1706
  %v1825 = vpop.f32.mrb[0].mxu0
  %v1826 = vadd.f32 %v1757, %v1825
  %v1827 = vpop.f32.mrb[0].mxu0
  %1828 = vmatprep.mubr.f32.mxu0 %v1712
  %1829 = vmatmul.mubr.f32.gmra.mrb[0].mxu0 %v1710
  %v1830 = vpop.f32.mrb[0].mxu0
  %v1831 = vadd.f32 %v1757, %v1830
  %v1832 = vpop.f32.mrb[0].mxu0
  %1833 = vmatprep.mubr.f32.mxu0 %v1716
  %1834 = vmatmul.mubr.f32.gmra.mrb[0].mxu0 %v1714
  %v1835 = vpop.f32.mrb[0].mxu0
  %v1836 = vadd.f32 %v1757, %v1835
  %v1837 = vpop.f32.mrb[0].mxu0
  %1838 = vdwg.mxu0
  %vm1839 = vcmask 130048
  %1840 = vst.msk [vmem:[%s13] sm:$0xff] %vm1839, %v1826
  %1841 = vst.msk [vmem:[%s13 + $0x8] sm:$0xff] %vm1839, %v1831
  %vm1842 = vcmask 128000
  %1843 = vst.msk [vmem:[%s13 + $0x10] sm:$0x3f] %vm1842, %v1836
  // Predicated region
  $region54: #{model3_forward.1} parent=0 // pred_check
    _
  $region55: #{model3_forward.1} parent=0 // pred_check_branch
    %1845 = sbr.rel (0) target = $region57
  $region56: #{model3_forward.1} parent=0 // pred_region
    _
  $region57: #{model3_forward.1} parent=0 // pred_fallthru
    _
  // Predicated region
  $region58: #{model3_forward.1} parent=0 // pred_check
    _
  $region59: #{model3_forward.1} parent=0 // pred_check_branch
    %1847 = sbr.rel (0) target = $region61
  $region60: #{model3_forward.1} parent=0 // pred_region
    _
  $region61: #{model3_forward.1} parent=0 // pred_fallthru
    _

</llo_original>
